<compile_context>
chip_gen: v6e
topology: v6e:2x2x1
jax: 0.10.0
libtpu: 0.0.40
codegen_flags: <defaults>
</compile_context>

<pallas_src>
import functools

import jax
import jax.numpy as jnp
from jax.experimental import pallas as pl
from jax.experimental.pallas import tpu as pltpu

EPS = 1e-5      # BatchNorm eps
DIM = 64        # embedding / hidden dim
SLAB = 4 * DIM  # fused, lane-dense output width (256 = 2 * 128 lanes)

# Weight-slab row offsets (multiples of 16 -> bf16 sublane-tile aligned slices).
_W1S_R  = 0     # (60, 16)  share conv1
_W2S_R  = 64    # (16, 64)  share conv2
_W1PN_R = 80    # (64, 32)  merged phy/net conv1 (feature split folded in)
_W2P_R  = 144   # (16, 64)  phy conv2
_W2N_R  = 160   # (16, 64)  net conv2
_WOUT_R = 176   # (64, 64)  out_layer
_WMC_R  = 240   # (60, 64)  mul_conv (k=1 Conv1d)
_WPN_R  = 304   # (128, 64) packed phy(64->1)/net(64->3) projection
_WSLAB_ROWS = 432


# ----------------------------------------------------------------------------
# Fused Pallas kernel (one grid step == one batch element)
# ----------------------------------------------------------------------------
def _mgdn_kernel(a_mul_ref, a_phy_ref, a_net_ref, x_ref, w_ref,
                 emul_ref, ephy_ref, enet_ref, vec_ref, o_ref):
    bf16 = jnp.bfloat16

    def mm(a, b):
        # bf16 operands (no-op cast when already bf16), f32 accumulation.
        return jnp.dot(a.astype(bf16), b.astype(bf16),
                       preferred_element_type=jnp.float32)

    # packed per-channel vectors (one (16, 128) tile instead of 12 tiny DMAs)
    v = vec_ref[...]
    c1_sh, c2_sh = v[0:1, :16], v[1:2, :64]
    c1_ph, c2_ph = v[2:3, :16], v[3:4, :64]
    c1_nt, c2_nt = v[4:5, :16], v[5:6, :64]
    t_mul, b_out = v[6:7, :64], v[7:8, :64]
    t_phy, t_net = v[8:9, :64], v[9:10, :64]
    b_pn, b_mc = v[10:11, :64], v[11:12, :64]

    # static slices out of the single packed bf16 weight slab
    w1s  = w_ref[_W1S_R:_W1S_R + 60, 0:16]
    w2s  = w_ref[_W2S_R:_W2S_R + 16, 0:64]
    w1pn = w_ref[_W1PN_R:_W1PN_R + 64, 0:32]
    w2p  = w_ref[_W2P_R:_W2P_R + 16, 0:64]
    w2n  = w_ref[_W2N_R:_W2N_R + 16, 0:64]
    wout = w_ref[_WOUT_R:_WOUT_R + 64, 0:64]
    wmc  = w_ref[_WMC_R:_WMC_R + 60, 0:64]
    wpn  = w_ref[_WPN_R:_WPN_R + 128, 0:64]

    a_mul, a_phy, a_net = a_mul_ref[...], a_phy_ref[...], a_net_ref[...]
    x = x_ref[...]                                                  # (N, 60) bf16

    def gcn_tail(a, t, c1, w2, c2):
        # GCNLayer after conv1's x@W1: aggregate, relu(bn1), conv2, bn2,
        # log_softmax; eval-mode BNs are folded into w2/c1/c2.
        h = jnp.maximum(mm(a, t) + c1, 0.0)
        h2 = mm(a, mm(h, w2)) + c2
        m = jnp.max(h2, axis=-1, keepdims=True)
        lse = m + jnp.log(jnp.sum(jnp.exp(h2 - m), axis=-1, keepdims=True))
        return h2 - lse

    # ---- shared ("mul") GCN + out path ----
    y = gcn_tail(a_mul, mm(x, w1s), c1_sh, w2s, c2_sh)              # (N, 64)
    h = jnp.maximum(y * emul_ref[...] + t_mul, 0.0)                 # emb*bn folded
    out = mm(h, wout) + b_out                                       # (N, 64)

    # ---- phy / net GCNs: the out[:, :16] / out[:, 16:] feature split is
    #      folded into one merged (64, 32) conv1 weight -> single K=64 pass ----
    t_pn = mm(out, w1pn)                                            # (N, 32)
    x_phy = gcn_tail(a_phy, t_pn[:, 0:16], c1_ph, w2p, c2_ph)       # (N, 64)
    x_net = gcn_tail(a_net, t_pn[:, 16:32], c1_nt, w2n, c2_nt)      # (N, 64)

    # ---- phy / net out paths: one K=128 packed projection ----
    h_phy = jnp.maximum(x_phy * ephy_ref[...] + t_phy, 0.0)
    h_net = jnp.maximum(x_net * enet_ref[...] + t_net, 0.0)
    proj = mm(jnp.concatenate([h_phy, h_net], axis=-1), wpn) + b_pn  # (N, 64)

    # ---- mul_conv (kernel-size-1 Conv1d == matmul), fused for free ----
    mul_x = mm(x, wmc) + b_mc                                       # (N, 64)

    # two 128-lane-dense stores (wrapper slices the slab apart)
    o_ref[:, 0:128] = jnp.concatenate([x_phy, x_net], axis=-1)
    o_ref[:, 128:256] = jnp.concatenate([mul_x, proj], axis=-1)


def mgdn_fused(a_mul, a_phy, a_net, x, wslab, emul, ephy, enet, vecs,
               *, batch, node_num):
    N = node_num
    BN = batch * N
    bcast = lambda b: (0, 0)
    return pl.pallas_call(
        _mgdn_kernel,
        out_shape=jax.ShapeDtypeStruct((BN, SLAB), jnp.float32),
        grid=(batch,),
        in_specs=[
            pl.BlockSpec(a_mul.shape, bcast),              # (N, N) broadcast
            pl.BlockSpec(a_phy.shape, bcast),
            pl.BlockSpec(a_net.shape, bcast),
            pl.BlockSpec((N, x.shape[1]), lambda b: (b, 0)),  # per-batch block
            pl.BlockSpec(wslab.shape, bcast),               # one weight slab
            pl.BlockSpec(emul.shape, bcast),                # (N, 64) broadcast
            pl.BlockSpec(ephy.shape, bcast),
            pl.BlockSpec(enet.shape, bcast),
            pl.BlockSpec(vecs.shape, bcast),                # (16, 128) vectors
        ],
        out_specs=pl.BlockSpec((N, SLAB), lambda b: (b, 0)),
        compiler_params=pltpu.CompilerParams(
            dimension_semantics=("parallel",),
            vmem_limit_bytes=32 * 1024 * 1024),
    )(a_mul, a_phy, a_net, x, wslab, emul, ephy, enet, vecs)


# ----------------------------------------------------------------------------
# Plain-JAX glue (graph construction, BN folding, parameter packing)
# ----------------------------------------------------------------------------
def bn_fold(gamma, beta, rm, rv):
    """Fold eval-mode BatchNorm1d into per-channel scale/shift."""
    s = gamma / jnp.sqrt(rv + EPS)
    return s, beta - rm * s


def build_topk_adjacency(emb, topk):
    """Cosine-sim top-k graph + GCNConv symmetric normalization (dense, small N)."""
    # TODO(synk): top-k selection and scatter-based adjacency build stay in
    # plain JAX (lax.top_k / .at[].set) — no clean Pallas equivalent; N x N glue.
    norms = jnp.linalg.norm(emb, axis=-1)
    cos = (emb @ emb.T) / (norms[:, None] * norms[None, :] + 1e-12)
    _, topk_idx = jax.lax.top_k(cos, topk)                 # (N, topk): sources for target i
    N = emb.shape[0]
    rows = jnp.repeat(jnp.arange(N), topk)
    a = jnp.zeros((N, N), jnp.float32).at[rows, topk_idx.reshape(-1)].set(1.0)
    a = a.at[jnp.arange(N), jnp.arange(N)].set(1.0)        # add_remaining_self_loops
    deg = a.sum(axis=1)                                    # target-indexed degree (PyG gcn_norm)
    dinv = jax.lax.rsqrt(deg)
    a_hat = a * dinv[:, None] * dinv[None, :]
    return a_hat, topk_idx


def fold_gcn(g):
    """Fold both eval-mode BNs of a GCNLayer into column-scaled W's + shifts."""
    s1, t1 = bn_fold(**g['bn1'])
    s2, t2 = bn_fold(**g['bn2'])
    w1 = g['w1'] * s1[None, :]
    c1 = g['b1'][0] * s1 + t1
    w2 = g['w2'] * s2[None, :]
    c2 = g['b2'][0] * s2 + t2
    return w1, c1, w2, c2


def pack_weight_slab(w1s, w2s, w1pn, w2p, w2n, wout, wmc, wpn):
    """Coalesce all matmul weights into one bf16 (432, 128) lane-aligned slab."""
    W = jnp.zeros((_WSLAB_ROWS, 128), jnp.float32)
    W = W.at[_W1S_R:_W1S_R + 60, 0:16].set(w1s)
    W = W.at[_W2S_R:_W2S_R + 16, 0:64].set(w2s)
    W = W.at[_W1PN_R:_W1PN_R + 64, 0:32].set(w1pn)
    W = W.at[_W2P_R:_W2P_R + 16, 0:64].set(w2p)
    W = W.at[_W2N_R:_W2N_R + 16, 0:64].set(w2n)
    W = W.at[_WOUT_R:_WOUT_R + 64, 0:64].set(wout)
    W = W.at[_WMC_R:_WMC_R + 60, 0:64].set(wmc)
    W = W.at[_WPN_R:_WPN_R + 128, 0:64].set(wpn)
    return W.astype(jnp.bfloat16)


def init_params(key, node_num, dim=64, input_dim=60):
    keys = iter(jax.random.split(key, 80))

    def u(shape, scale):
        return jax.random.uniform(next(keys), shape, jnp.float32,
                                  minval=-scale, maxval=scale)

    def bn(c):
        return dict(gamma=1.0 + u((c,), 0.1), beta=u((c,), 0.1),
                    rm=u((c,), 0.1), rv=1.0 + u((c,), 0.2))

    def gcn(cin, cmid, cout):
        return dict(w1=u((cin, cmid), (1.0 / cin) ** 0.5), b1=u((1, cmid), 0.1),
                    w2=u((cmid, cout), (1.0 / cmid) ** 0.5), b2=u((1, cout), 0.1),
                    bn1=bn(cmid), bn2=bn(cout))

    def lin(cin, cout):
        s = (1.0 / cin) ** 0.5
        return dict(w=u((cin, cout), s), b=u((1, cout), s))

    return dict(
        mul_emb=u((node_num, dim), 1.0),
        phy_emb=u((node_num, dim), 1.0),
        net_emb=u((node_num, dim), 1.0),
        share_gcn=gcn(input_dim, 16, dim),   # GCNLayer(60 -> 16 -> 64)
        phy_gcn=gcn(16, 16, 64),             # GCNLayer(16 -> 16 -> 64)
        net_gcn=gcn(48, 16, 64),             # GCNLayer(48 -> 16 -> 64)
        bn_out=bn(dim),
        phy_bn_out=bn(dim),
        net_bn_out=bn(dim),
        out_layer=lin(64, 64),
        phy_out_layer=lin(64, 1),
        net_out_layer=lin(64, 3),
        mul_conv=lin(60, 64),                # Conv1d(60, 64, k=1) as matmul
    )


def mgdn_forward(params, data, topk):
    B, N, F = data.shape
    x = data.reshape(B * N, F)

    # learned top-k graphs; one (N,N) normalized adjacency per graph,
    # broadcast across the batch grid (== torch's block-diagonal batched graph).
    a_mul, learned_graph = build_topk_adjacency(params['mul_emb'], topk)
    a_phy, _ = build_topk_adjacency(params['phy_emb'], topk)
    a_net, _ = build_topk_adjacency(params['net_emb'], topk)

    # ---- fold eval-mode BNs into weights / shifts ----
    w1s, c1s, w2s, c2s = fold_gcn(params['share_gcn'])      # (60,16),(16,),(16,64),(64,)
    w1p, c1p, w2p, c2p = fold_gcn(params['phy_gcn'])        # (16,16),(16,),(16,64),(64,)
    w1n, c1n, w2n, c2n = fold_gcn(params['net_gcn'])        # (48,16),(16,),(16,64),(64,)

    # fold the out[:, :16] / out[:, 16:] feature split into one merged (64,32) W1
    w1pn = jnp.zeros((64, 32), jnp.float32)
    w1pn = w1pn.at[:16, 0:16].set(w1p).at[16:, 16:32].set(w1n)

    # out-path BN folds; the scale is folded into the (single, untiled) embedding
    s_m, t_m = bn_fold(**params['bn_out'])
    s_p, t_p = bn_fold(**params['phy_bn_out'])
    s_n, t_n = bn_fold(**params['net_bn_out'])
    emul = params['mul_emb'] * s_m[None, :]                  # (N, 64)
    ephy = params['phy_emb'] * s_p[None, :]
    enet = params['net_emb'] * s_n[None, :]

    # block-diagonal packed phy(64->1)/net(64->3) projection -> lane-dense out
    w_pn = jnp.zeros((128, 64), jnp.float32)
    w_pn = w_pn.at[:64, 0:1].set(params['phy_out_layer']['w'])
    w_pn = w_pn.at[64:, 1:4].set(params['net_out_layer']['w'])
    b_pn = jnp.zeros((64,), jnp.float32)
    b_pn = b_pn.at[0].set(params['phy_out_layer']['b'][0, 0])
    b_pn = b_pn.at[1:4].set(params['net_out_layer']['b'][0])

    # coalesce all small per-channel vectors into one (16, 128) parameter tile
    vecs = jnp.zeros((16, 128), jnp.float32)
    vecs = vecs.at[0, :16].set(c1s).at[1, :64].set(c2s)
    vecs = vecs.at[2, :16].set(c1p).at[3, :64].set(c2p)
    vecs = vecs.at[4, :16].set(c1n).at[5, :64].set(c2n)
    vecs = vecs.at[6, :64].set(t_m).at[7, :64].set(params['out_layer']['b'][0])
    vecs = vecs.at[8, :64].set(t_p).at[9, :64].set(t_n)
    vecs = vecs.at[10, :64].set(b_pn).at[11, :64].set(params['mul_conv']['b'][0])

    # one bf16 weight slab (single DMA instead of nine tiny padded tiles)
    wslab = pack_weight_slab(w1s, w2s, w1pn, w2p, w2n,
                             params['out_layer']['w'], params['mul_conv']['w'],
                             w_pn)

    bf16 = jnp.bfloat16
    slab = mgdn_fused(a_mul.astype(bf16), a_phy.astype(bf16), a_net.astype(bf16),
                      x.astype(bf16), wslab, emul, ephy, enet, vecs,
                      batch=B, node_num=N)

    # slice the lane-dense slab apart (cheap XLA slices on the final output)
    x_phy = slab[:, 0:64].reshape(B, N, 64)
    x_net = slab[:, 64:128].reshape(B, N, 64)
    mul_x = slab[:, 128:192]
    phy_out = slab[:, 192].reshape(B, N)          # (B, N)
    net_out = slab[:, 193:196].reshape(B, N * 3)  # (B, 3N), node-major like torch

    outs = [phy_out, net_out]
    return (outs, learned_graph, x_net, x_phy), mul_x


if __name__ == "__main__":
    key = jax.random.PRNGKey(0)
    kp, kd = jax.random.split(key)

    B, N, F = 2, 16, 60          # batch, node_num, input_dim
    topk = 4                     # <= node_num for this small synthetic config

    params = init_params(kp, node_num=N, dim=64, input_dim=F)
    data = jax.random.normal(kd, (B, N, F), jnp.float32)

    fwd = jax.jit(functools.partial(mgdn_forward, topk=topk))
    (outs, learned_graph, x_net, x_phy), mul_x = fwd(params, data)
    jax.block_until_ready((outs, learned_graph, x_net, x_phy, mul_x))

    assert outs[0].shape == (B, N)
    assert outs[1].shape == (B, N * 3)
    assert learned_graph.shape == (N, topk)
    assert x_net.shape == (B, N, 64) and x_phy.shape == (B, N, 64)
    assert mul_x.shape == (B * N, 64)
    print("KERNEL_OK")
</pallas_src>

<mosaic_0001>
module attributes {stable_mosaic.version = 11 : i64} {
  func.func @_mgdn_kernel(%arg0: i32, %arg1: memref<16x16xbf16, #tpu.memory_space<vmem>>, %arg2: memref<16x16xbf16, #tpu.memory_space<vmem>>, %arg3: memref<16x16xbf16, #tpu.memory_space<vmem>>, %arg4: memref<16x60xbf16, #tpu.memory_space<vmem>>, %arg5: memref<432x128xbf16, #tpu.memory_space<vmem>>, %arg6: memref<16x64xf32, #tpu.memory_space<vmem>>, %arg7: memref<16x64xf32, #tpu.memory_space<vmem>>, %arg8: memref<16x64xf32, #tpu.memory_space<vmem>>, %arg9: memref<16x128xf32, #tpu.memory_space<vmem>>, %arg10: memref<16x256xf32, #tpu.memory_space<vmem>>) attributes {dimension_semantics = [#tpu.dimension_semantics<parallel>], iteration_bounds = array<i64: 2>, scalar_prefetch = 0 : i64, scratch_operands = 0 : i64, tpu.core_type = #tpu.core_type<tc>, window_params = [{pipeline_mode = #tpu.pipeline_mode<synchronous>, transform_indices = @transform_0, window_bounds = array<i64: 16, 16>}, {pipeline_mode = #tpu.pipeline_mode<synchronous>, transform_indices = @transform_1, window_bounds = array<i64: 16, 16>}, {pipeline_mode = #tpu.pipeline_mode<synchronous>, transform_indices = @transform_2, window_bounds = array<i64: 16, 16>}, {transform_indices = @transform_3, window_bounds = array<i64: 16, 60>}, {pipeline_mode = #tpu.pipeline_mode<synchronous>, transform_indices = @transform_4, window_bounds = array<i64: 432, 128>}, {pipeline_mode = #tpu.pipeline_mode<synchronous>, transform_indices = @transform_5, window_bounds = array<i64: 16, 64>}, {pipeline_mode = #tpu.pipeline_mode<synchronous>, transform_indices = @transform_6, window_bounds = array<i64: 16, 64>}, {pipeline_mode = #tpu.pipeline_mode<synchronous>, transform_indices = @transform_7, window_bounds = array<i64: 16, 64>}, {pipeline_mode = #tpu.pipeline_mode<synchronous>, transform_indices = @transform_8, window_bounds = array<i64: 16, 128>}, {transform_indices = @transform_9, window_bounds = array<i64: 16, 256>}]} {
    %c0 = arith.constant 0 : index
    %c0_0 = arith.constant 0 : index
    %0 = vector.load %arg9[%c0, %c0_0] : memref<16x128xf32, #tpu.memory_space<vmem>>, vector<16x128xf32>
    %1 = vector.extract_strided_slice %0 {offsets = [0, 0], sizes = [1, 16], strides = [1, 1]} : vector<16x128xf32> to vector<1x16xf32>
    %2 = vector.extract_strided_slice %0 {offsets = [1, 0], sizes = [1, 64], strides = [1, 1]} : vector<16x128xf32> to vector<1x64xf32>
    %3 = vector.extract_strided_slice %0 {offsets = [2, 0], sizes = [1, 16], strides = [1, 1]} : vector<16x128xf32> to vector<1x16xf32>
    %4 = vector.extract_strided_slice %0 {offsets = [3, 0], sizes = [1, 64], strides = [1, 1]} : vector<16x128xf32> to vector<1x64xf32>
    %5 = vector.extract_strided_slice %0 {offsets = [4, 0], sizes = [1, 16], strides = [1, 1]} : vector<16x128xf32> to vector<1x16xf32>
    %6 = vector.extract_strided_slice %0 {offsets = [5, 0], sizes = [1, 64], strides = [1, 1]} : vector<16x128xf32> to vector<1x64xf32>
    %7 = vector.extract_strided_slice %0 {offsets = [6, 0], sizes = [1, 64], strides = [1, 1]} : vector<16x128xf32> to vector<1x64xf32>
    %8 = vector.extract_strided_slice %0 {offsets = [7, 0], sizes = [1, 64], strides = [1, 1]} : vector<16x128xf32> to vector<1x64xf32>
    %9 = vector.extract_strided_slice %0 {offsets = [8, 0], sizes = [1, 64], strides = [1, 1]} : vector<16x128xf32> to vector<1x64xf32>
    %10 = vector.extract_strided_slice %0 {offsets = [9, 0], sizes = [1, 64], strides = [1, 1]} : vector<16x128xf32> to vector<1x64xf32>
    %11 = vector.extract_strided_slice %0 {offsets = [10, 0], sizes = [1, 64], strides = [1, 1]} : vector<16x128xf32> to vector<1x64xf32>
    %12 = vector.extract_strided_slice %0 {offsets = [11, 0], sizes = [1, 64], strides = [1, 1]} : vector<16x128xf32> to vector<1x64xf32>
    %c0_1 = arith.constant 0 : index
    %c0_2 = arith.constant 0 : index
    %13 = vector.load %arg5[%c0_1, %c0_2] : memref<432x128xbf16, #tpu.memory_space<vmem>>, vector<60x16xbf16>
    %c64 = arith.constant 64 : index
    %c0_3 = arith.constant 0 : index
    %14 = vector.load %arg5[%c64, %c0_3] : memref<432x128xbf16, #tpu.memory_space<vmem>>, vector<16x64xbf16>
    %c80 = arith.constant 80 : index
    %c0_4 = arith.constant 0 : index
    %15 = vector.load %arg5[%c80, %c0_4] : memref<432x128xbf16, #tpu.memory_space<vmem>>, vector<64x32xbf16>
    %c144 = arith.constant 144 : index
    %c0_5 = arith.constant 0 : index
    %16 = vector.load %arg5[%c144, %c0_5] : memref<432x128xbf16, #tpu.memory_space<vmem>>, vector<16x64xbf16>
    %c160 = arith.constant 160 : index
    %c0_6 = arith.constant 0 : index
    %17 = vector.load %arg5[%c160, %c0_6] : memref<432x128xbf16, #tpu.memory_space<vmem>>, vector<16x64xbf16>
    %c176 = arith.constant 176 : index
    %c0_7 = arith.constant 0 : index
    %18 = vector.load %arg5[%c176, %c0_7] : memref<432x128xbf16, #tpu.memory_space<vmem>>, vector<64x64xbf16>
    %c240 = arith.constant 240 : index
    %c0_8 = arith.constant 0 : index
    %19 = vector.load %arg5[%c240, %c0_8] : memref<432x128xbf16, #tpu.memory_space<vmem>>, vector<60x64xbf16>
    %c304 = arith.constant 304 : index
    %c0_9 = arith.constant 0 : index
    %20 = vector.load %arg5[%c304, %c0_9] : memref<432x128xbf16, #tpu.memory_space<vmem>>, vector<128x64xbf16>
    %c0_10 = arith.constant 0 : index
    %c0_11 = arith.constant 0 : index
    %21 = vector.load %arg1[%c0_10, %c0_11] : memref<16x16xbf16, #tpu.memory_space<vmem>>, vector<16x16xbf16>
    %c0_12 = arith.constant 0 : index
    %c0_13 = arith.constant 0 : index
    %22 = vector.load %arg2[%c0_12, %c0_13] : memref<16x16xbf16, #tpu.memory_space<vmem>>, vector<16x16xbf16>
    %c0_14 = arith.constant 0 : index
    %c0_15 = arith.constant 0 : index
    %23 = vector.load %arg3[%c0_14, %c0_15] : memref<16x16xbf16, #tpu.memory_space<vmem>>, vector<16x16xbf16>
    %c0_16 = arith.constant 0 : index
    %c0_17 = arith.constant 0 : index
    %24 = vector.load %arg4[%c0_16, %c0_17] : memref<16x60xbf16, #tpu.memory_space<vmem>>, vector<16x60xbf16>
    %cst = arith.constant dense<0.000000e+00> : vector<16x16xf32>
    %25 = tpu.matmul %24, %13, %cst {dimension_numbers = #tpu.dot_dimension_numbers<[1], [0], [0], [1], [0, 0, 1, 1], [], []>} : vector<16x60xbf16>, vector<60x16xbf16>, vector<16x16xf32> -> vector<16x16xf32>
    %26 = arith.truncf %25 : vector<16x16xf32> to vector<16x16xbf16>
    %cst_18 = arith.constant dense<0.000000e+00> : vector<16x16xf32>
    %27 = tpu.matmul %21, %26, %cst_18 {dimension_numbers = #tpu.dot_dimension_numbers<[1], [0], [0], [1], [0, 0, 1, 1], [], []>} : vector<16x16xbf16>, vector<16x16xbf16>, vector<16x16xf32> -> vector<16x16xf32>
    %28 = vector.broadcast %1 : vector<1x16xf32> to vector<16x16xf32>
    %29 = arith.addf %27, %28 : vector<16x16xf32>
    %cst_19 = arith.constant 0.000000e+00 : f32
    %30 = vector.broadcast %cst_19 : f32 to vector<16x16xf32>
    %31 = arith.maximumf %29, %30 : vector<16x16xf32>
    %32 = arith.truncf %31 : vector<16x16xf32> to vector<16x16xbf16>
    %cst_20 = arith.constant dense<0.000000e+00> : vector<16x64xf32>
    %33 = tpu.matmul %32, %14, %cst_20 {dimension_numbers = #tpu.dot_dimension_numbers<[1], [0], [0], [1], [0, 0, 1, 1], [], []>} : vector<16x16xbf16>, vector<16x64xbf16>, vector<16x64xf32> -> vector<16x64xf32>
    %34 = arith.truncf %33 : vector<16x64xf32> to vector<16x64xbf16>
    %cst_21 = arith.constant dense<0.000000e+00> : vector<16x64xf32>
    %35 = tpu.matmul %21, %34, %cst_21 {dimension_numbers = #tpu.dot_dimension_numbers<[1], [0], [0], [1], [0, 0, 1, 1], [], []>} : vector<16x16xbf16>, vector<16x64xbf16>, vector<16x64xf32> -> vector<16x64xf32>
    %36 = vector.broadcast %2 : vector<1x64xf32> to vector<16x64xf32>
    %37 = arith.addf %35, %36 : vector<16x64xf32>
    %cst_22 = arith.constant dense<0xFF800000> : vector<16xf32>
    %38 = vector.multi_reduction <maximumf>, %37, %cst_22 [1] : vector<16x64xf32> to vector<16xf32>
    %39 = vector.shape_cast %38 : vector<16xf32> to vector<16x1xf32>
    %40 = vector.broadcast %39 : vector<16x1xf32> to vector<16x64xf32>
    %41 = arith.subf %37, %40 : vector<16x64xf32>
    %42 = math.exp %41 : vector<16x64xf32>
    %cst_23 = arith.constant dense<0.000000e+00> : vector<16xf32>
    %43 = vector.multi_reduction <add>, %42, %cst_23 [1] : vector<16x64xf32> to vector<16xf32>
    %44 = vector.shape_cast %43 : vector<16xf32> to vector<16x1xf32>
    %45 = math.log %44 : vector<16x1xf32>
    %46 = arith.addf %39, %45 : vector<16x1xf32>
    %47 = vector.broadcast %46 : vector<16x1xf32> to vector<16x64xf32>
    %48 = arith.subf %37, %47 : vector<16x64xf32>
    %c0_24 = arith.constant 0 : index
    %c0_25 = arith.constant 0 : index
    %49 = vector.load %arg6[%c0_24, %c0_25] : memref<16x64xf32, #tpu.memory_space<vmem>>, vector<16x64xf32>
    %50 = arith.mulf %48, %49 : vector<16x64xf32>
    %51 = vector.broadcast %7 : vector<1x64xf32> to vector<16x64xf32>
    %52 = arith.addf %50, %51 : vector<16x64xf32>
    %cst_26 = arith.constant 0.000000e+00 : f32
    %53 = vector.broadcast %cst_26 : f32 to vector<16x64xf32>
    %54 = arith.maximumf %52, %53 : vector<16x64xf32>
    %55 = arith.truncf %54 : vector<16x64xf32> to vector<16x64xbf16>
    %cst_27 = arith.constant dense<0.000000e+00> : vector<16x64xf32>
    %56 = tpu.matmul %55, %18, %cst_27 {dimension_numbers = #tpu.dot_dimension_numbers<[1], [0], [0], [1], [0, 0, 1, 1], [], []>} : vector<16x64xbf16>, vector<64x64xbf16>, vector<16x64xf32> -> vector<16x64xf32>
    %57 = vector.broadcast %8 : vector<1x64xf32> to vector<16x64xf32>
    %58 = arith.addf %56, %57 : vector<16x64xf32>
    %59 = arith.truncf %58 : vector<16x64xf32> to vector<16x64xbf16>
    %cst_28 = arith.constant dense<0.000000e+00> : vector<16x32xf32>
    %60 = tpu.matmul %59, %15, %cst_28 {dimension_numbers = #tpu.dot_dimension_numbers<[1], [0], [0], [1], [0, 0, 1, 1], [], []>} : vector<16x64xbf16>, vector<64x32xbf16>, vector<16x32xf32> -> vector<16x32xf32>
    %61 = vector.extract_strided_slice %60 {offsets = [0, 0], sizes = [16, 16], strides = [1, 1]} : vector<16x32xf32> to vector<16x16xf32>
    %62 = arith.truncf %61 : vector<16x16xf32> to vector<16x16xbf16>
    %cst_29 = arith.constant dense<0.000000e+00> : vector<16x16xf32>
    %63 = tpu.matmul %22, %62, %cst_29 {dimension_numbers = #tpu.dot_dimension_numbers<[1], [0], [0], [1], [0, 0, 1, 1], [], []>} : vector<16x16xbf16>, vector<16x16xbf16>, vector<16x16xf32> -> vector<16x16xf32>
    %64 = vector.broadcast %3 : vector<1x16xf32> to vector<16x16xf32>
    %65 = arith.addf %63, %64 : vector<16x16xf32>
    %cst_30 = arith.constant 0.000000e+00 : f32
    %66 = vector.broadcast %cst_30 : f32 to vector<16x16xf32>
    %67 = arith.maximumf %65, %66 : vector<16x16xf32>
    %68 = arith.truncf %67 : vector<16x16xf32> to vector<16x16xbf16>
    %cst_31 = arith.constant dense<0.000000e+00> : vector<16x64xf32>
    %69 = tpu.matmul %68, %16, %cst_31 {dimension_numbers = #tpu.dot_dimension_numbers<[1], [0], [0], [1], [0, 0, 1, 1], [], []>} : vector<16x16xbf16>, vector<16x64xbf16>, vector<16x64xf32> -> vector<16x64xf32>
    %70 = arith.truncf %69 : vector<16x64xf32> to vector<16x64xbf16>
    %cst_32 = arith.constant dense<0.000000e+00> : vector<16x64xf32>
    %71 = tpu.matmul %22, %70, %cst_32 {dimension_numbers = #tpu.dot_dimension_numbers<[1], [0], [0], [1], [0, 0, 1, 1], [], []>} : vector<16x16xbf16>, vector<16x64xbf16>, vector<16x64xf32> -> vector<16x64xf32>
    %72 = vector.broadcast %4 : vector<1x64xf32> to vector<16x64xf32>
    %73 = arith.addf %71, %72 : vector<16x64xf32>
    %cst_33 = arith.constant dense<0xFF800000> : vector<16xf32>
    %74 = vector.multi_reduction <maximumf>, %73, %cst_33 [1] : vector<16x64xf32> to vector<16xf32>
    %75 = vector.shape_cast %74 : vector<16xf32> to vector<16x1xf32>
    %76 = vector.broadcast %75 : vector<16x1xf32> to vector<16x64xf32>
    %77 = arith.subf %73, %76 : vector<16x64xf32>
    %78 = math.exp %77 : vector<16x64xf32>
    %cst_34 = arith.constant dense<0.000000e+00> : vector<16xf32>
    %79 = vector.multi_reduction <add>, %78, %cst_34 [1] : vector<16x64xf32> to vector<16xf32>
    %80 = vector.shape_cast %79 : vector<16xf32> to vector<16x1xf32>
    %81 = math.log %80 : vector<16x1xf32>
    %82 = arith.addf %75, %81 : vector<16x1xf32>
    %83 = vector.broadcast %82 : vector<16x1xf32> to vector<16x64xf32>
    %84 = arith.subf %73, %83 : vector<16x64xf32>
    %85 = vector.extract_strided_slice %60 {offsets = [0, 16], sizes = [16, 16], strides = [1, 1]} : vector<16x32xf32> to vector<16x16xf32>
    %86 = arith.truncf %85 : vector<16x16xf32> to vector<16x16xbf16>
    %cst_35 = arith.constant dense<0.000000e+00> : vector<16x16xf32>
    %87 = tpu.matmul %23, %86, %cst_35 {dimension_numbers = #tpu.dot_dimension_numbers<[1], [0], [0], [1], [0, 0, 1, 1], [], []>} : vector<16x16xbf16>, vector<16x16xbf16>, vector<16x16xf32> -> vector<16x16xf32>
    %88 = vector.broadcast %5 : vector<1x16xf32> to vector<16x16xf32>
    %89 = arith.addf %87, %88 : vector<16x16xf32>
    %cst_36 = arith.constant 0.000000e+00 : f32
    %90 = vector.broadcast %cst_36 : f32 to vector<16x16xf32>
    %91 = arith.maximumf %89, %90 : vector<16x16xf32>
    %92 = arith.truncf %91 : vector<16x16xf32> to vector<16x16xbf16>
    %cst_37 = arith.constant dense<0.000000e+00> : vector<16x64xf32>
    %93 = tpu.matmul %92, %17, %cst_37 {dimension_numbers = #tpu.dot_dimension_numbers<[1], [0], [0], [1], [0, 0, 1, 1], [], []>} : vector<16x16xbf16>, vector<16x64xbf16>, vector<16x64xf32> -> vector<16x64xf32>
    %94 = arith.truncf %93 : vector<16x64xf32> to vector<16x64xbf16>
    %cst_38 = arith.constant dense<0.000000e+00> : vector<16x64xf32>
    %95 = tpu.matmul %23, %94, %cst_38 {dimension_numbers = #tpu.dot_dimension_numbers<[1], [0], [0], [1], [0, 0, 1, 1], [], []>} : vector<16x16xbf16>, vector<16x64xbf16>, vector<16x64xf32> -> vector<16x64xf32>
    %96 = vector.broadcast %6 : vector<1x64xf32> to vector<16x64xf32>
    %97 = arith.addf %95, %96 : vector<16x64xf32>
    %cst_39 = arith.constant dense<0xFF800000> : vector<16xf32>
    %98 = vector.multi_reduction <maximumf>, %97, %cst_39 [1] : vector<16x64xf32> to vector<16xf32>
    %99 = vector.shape_cast %98 : vector<16xf32> to vector<16x1xf32>
    %100 = vector.broadcast %99 : vector<16x1xf32> to vector<16x64xf32>
    %101 = arith.subf %97, %100 : vector<16x64xf32>
    %102 = math.exp %101 : vector<16x64xf32>
    %cst_40 = arith.constant dense<0.000000e+00> : vector<16xf32>
    %103 = vector.multi_reduction <add>, %102, %cst_40 [1] : vector<16x64xf32> to vector<16xf32>
    %104 = vector.shape_cast %103 : vector<16xf32> to vector<16x1xf32>
    %105 = math.log %104 : vector<16x1xf32>
    %106 = arith.addf %99, %105 : vector<16x1xf32>
    %107 = vector.broadcast %106 : vector<16x1xf32> to vector<16x64xf32>
    %108 = arith.subf %97, %107 : vector<16x64xf32>
    %c0_41 = arith.constant 0 : index
    %c0_42 = arith.constant 0 : index
    %109 = vector.load %arg7[%c0_41, %c0_42] : memref<16x64xf32, #tpu.memory_space<vmem>>, vector<16x64xf32>
    %110 = arith.mulf %84, %109 : vector<16x64xf32>
    %111 = vector.broadcast %9 : vector<1x64xf32> to vector<16x64xf32>
    %112 = arith.addf %110, %111 : vector<16x64xf32>
    %cst_43 = arith.constant 0.000000e+00 : f32
    %113 = vector.broadcast %cst_43 : f32 to vector<16x64xf32>
    %114 = arith.maximumf %112, %113 : vector<16x64xf32>
    %c0_44 = arith.constant 0 : index
    %c0_45 = arith.constant 0 : index
    %115 = vector.load %arg8[%c0_44, %c0_45] : memref<16x64xf32, #tpu.memory_space<vmem>>, vector<16x64xf32>
    %116 = arith.mulf %108, %115 : vector<16x64xf32>
    %117 = vector.broadcast %10 : vector<1x64xf32> to vector<16x64xf32>
    %118 = arith.addf %116, %117 : vector<16x64xf32>
    %cst_46 = arith.constant 0.000000e+00 : f32
    %119 = vector.broadcast %cst_46 : f32 to vector<16x64xf32>
    %120 = arith.maximumf %118, %119 : vector<16x64xf32>
    %121 = tpu.concatenate %114, %120 in 1 : vector<16x64xf32>, vector<16x64xf32> -> vector<16x128xf32>
    %122 = arith.truncf %121 : vector<16x128xf32> to vector<16x128xbf16>
    %cst_47 = arith.constant dense<0.000000e+00> : vector<16x64xf32>
    %123 = tpu.matmul %122, %20, %cst_47 {dimension_numbers = #tpu.dot_dimension_numbers<[1], [0], [0], [1], [0, 0, 1, 1], [], []>} : vector<16x128xbf16>, vector<128x64xbf16>, vector<16x64xf32> -> vector<16x64xf32>
    %124 = vector.broadcast %11 : vector<1x64xf32> to vector<16x64xf32>
    %125 = arith.addf %123, %124 : vector<16x64xf32>
    %cst_48 = arith.constant dense<0.000000e+00> : vector<16x64xf32>
    %126 = tpu.matmul %24, %19, %cst_48 {dimension_numbers = #tpu.dot_dimension_numbers<[1], [0], [0], [1], [0, 0, 1, 1], [], []>} : vector<16x60xbf16>, vector<60x64xbf16>, vector<16x64xf32> -> vector<16x64xf32>
    %127 = vector.broadcast %12 : vector<1x64xf32> to vector<16x64xf32>
    %128 = arith.addf %126, %127 : vector<16x64xf32>
    %129 = tpu.concatenate %84, %108 in 1 : vector<16x64xf32>, vector<16x64xf32> -> vector<16x128xf32>
    %c0_49 = arith.constant 0 : index
    %c0_50 = arith.constant 0 : index
    %130 = vector.load %arg10[%c0_49, %c0_50] : memref<16x256xf32, #tpu.memory_space<vmem>>, vector<16x128xf32>
    tpu.vector_store %arg10[%c0_49, %c0_50], %129 {strides = array<i32>} : memref<16x256xf32, #tpu.memory_space<vmem>>, vector<16x128xf32>,
    %131 = tpu.concatenate %128, %125 in 1 : vector<16x64xf32>, vector<16x64xf32> -> vector<16x128xf32>
    %c0_51 = arith.constant 0 : index
    %c128 = arith.constant 128 : index
    %132 = vector.load %arg10[%c0_51, %c128] : memref<16x256xf32, #tpu.memory_space<vmem>>, vector<16x128xf32>
    tpu.vector_store %arg10[%c0_51, %c128], %131 {strides = array<i32>} : memref<16x256xf32, #tpu.memory_space<vmem>>, vector<16x128xf32>,
    return
  }
  func.func @transform_0(%arg0: i32) -> (i32, i32) {
    %c0_i32 = arith.constant 0 : i32
    %c0_i32_0 = arith.constant 0 : i32
    %c0_i32_1 = arith.constant 0 : i32
    return %c0_i32, %c0_i32_0 : i32, i32
  }
  func.func @transform_1(%arg0: i32) -> (i32, i32) {
    %c0_i32 = arith.constant 0 : i32
    %c0_i32_0 = arith.constant 0 : i32
    %c0_i32_1 = arith.constant 0 : i32
    return %c0_i32, %c0_i32_0 : i32, i32
  }
  func.func @transform_2(%arg0: i32) -> (i32, i32) {
    %c0_i32 = arith.constant 0 : i32
    %c0_i32_0 = arith.constant 0 : i32
    %c0_i32_1 = arith.constant 0 : i32
    return %c0_i32, %c0_i32_0 : i32, i32
  }
  func.func @transform_3(%arg0: i32) -> (i32, i32) {
    %c0_i32 = arith.constant 0 : i32
    %c0_i32_0 = arith.constant 0 : i32
    return %arg0, %c0_i32 : i32, i32
  }
  func.func @transform_4(%arg0: i32) -> (i32, i32) {
    %c0_i32 = arith.constant 0 : i32
    %c0_i32_0 = arith.constant 0 : i32
    %c0_i32_1 = arith.constant 0 : i32
    return %c0_i32, %c0_i32_0 : i32, i32
  }
  func.func @transform_5(%arg0: i32) -> (i32, i32) {
    %c0_i32 = arith.constant 0 : i32
    %c0_i32_0 = arith.constant 0 : i32
    %c0_i32_1 = arith.constant 0 : i32
    return %c0_i32, %c0_i32_0 : i32, i32
  }
  func.func @transform_6(%arg0: i32) -> (i32, i32) {
    %c0_i32 = arith.constant 0 : i32
    %c0_i32_0 = arith.constant 0 : i32
    %c0_i32_1 = arith.constant 0 : i32
    return %c0_i32, %c0_i32_0 : i32, i32
  }
  func.func @transform_7(%arg0: i32) -> (i32, i32) {
    %c0_i32 = arith.constant 0 : i32
    %c0_i32_0 = arith.constant 0 : i32
    %c0_i32_1 = arith.constant 0 : i32
    return %c0_i32, %c0_i32_0 : i32, i32
  }
  func.func @transform_8(%arg0: i32) -> (i32, i32) {
    %c0_i32 = arith.constant 0 : i32
    %c0_i32_0 = arith.constant 0 : i32
    %c0_i32_1 = arith.constant 0 : i32
    return %c0_i32, %c0_i32_0 : i32, i32
  }
  func.func @transform_9(%arg0: i32) -> (i32, i32) {
    %c0_i32 = arith.constant 0 : i32
    %c0_i32_0 = arith.constant 0 : i32
    return %arg0, %c0_i32 : i32, i32
  }
}

</mosaic_0001>

<llo_original>
// kernel: squeeze.21
$region0: #{squeeze.21}
  %s0 = inlined_call_operand.vmem [shape: f32[32], index: 0, kind: input, shape index: {}]
  %s1 = inlined_call_operand.hbm [shape: f32[2,16], index: 1, kind: output, shape index: {}]
  $region1: #{squeeze.21} parent=0
    #allocation0 [shape = 'u8[1024]{0}', space=vmem, size = 0x400, scoped, tag = 'operand span for operand 1']
    #allocation1 [shape = 's32[1]{0}', space=sflag, size = 0x4, scoped, tag = 'scoped memory for squeeze.21']
    #allocation2 [shape = 'u8[4096]{0}', space=vmem, size = 0x1000, scoped, tag = 'scoped mem for output reshape']
    #allocation3 [shape = 'u8[4096]{0}', space=vmem, size = 0x1000, scoped, tag = 'scoped mem for input reshape']
    %2 = vsyncpa [#allocation1], 0
    %s4 = sshll.u32 1, 1
    %s5 = ssub.s32 %s4, 1
    %v6 = vld [vmem:[%s0] sm:%s5]
    %7 = vst [vmem:[#allocation3] sm:%s5] %v6
    %v8 = vld [vmem:[#allocation3] sm:$0x1]
    %vm9 = vcmask 130048
    %10 = vst.msk [vmem:[#allocation2] sm:$0x1] %vm9, %v8
    %v11 = vld [vmem:[#allocation3] sm:$0x1]
    %12 = vrot.lane.b32.xlu0 %v11, 112
    %v13 = vpop.permute.xlu0 %12
    %vm14 = vcmask 130048
    %s15 = scalar_lea.vmem [#allocation2], 1
    %16 = vst.msk [vmem:[%s15] sm:$0x1] %vm14, %v13
    %s18 = sshll.u32 1, 2
    %s19 = ssub.s32 %s18, 1
    %v21 = vld [vmem:[#allocation2] sm:%s19]
    %s22 = sshll.u32 1, 2
    %s23 = ssub.s32 %s22, 1
    %24 = vst [vmem:[#allocation0] sm:%s23] %v21
    %s26 = ssub.s32 32, 32
    %27 = vsyncadd [#allocation1], %s26
    %s29 = sshll.u32 [#allocation0], 4
    %s30 = int_to_ptr.vmem [resolvable:$true] %s29
    %32 = dma.vmem_to_hbm [thread:$0]  %s30, 32, %s1, [#allocation1]
    %33 = dma.done [#allocation1], 32
    %34 = vsyncpa [#allocation1], 1

// kernel: mgdn_forward.1
$region0: #{mgdn_forward.1}
  #allocation0 [shape = 'u32[]', space=smem, size = 0x4, offset = 0x4, fixed_abs, tag = 'smem constant byte address 0x4 - core index']
  #allocation1 [shape = 'u32[144,128]{1,0:T(1,128)}', space=vmem, size = 0x12000, scoped, tag = 'internal scratch']
  %s0 = inlined_call_operand.vmem [shape: bf16[16,16], index: 0, kind: input, shape index: {}]
  %s1 = inlined_call_operand.vmem [shape: bf16[16,16], index: 1, kind: input, shape index: {}]
  %s2 = inlined_call_operand.vmem [shape: bf16[16,16], index: 2, kind: input, shape index: {}]
  %s3 = inlined_call_operand.vmem [shape: bf16[32,60], index: 3, kind: input, shape index: {}]
  %s4 = inlined_call_operand.vmem [shape: bf16[432,128], index: 4, kind: input, shape index: {}]
  %s5 = inlined_call_operand.vmem [shape: f32[16,64], index: 5, kind: input, shape index: {}]
  %s6 = inlined_call_operand.vmem [shape: f32[16,64], index: 6, kind: input, shape index: {}]
  %s7 = inlined_call_operand.vmem [shape: f32[16,64], index: 7, kind: input, shape index: {}]
  %s8 = inlined_call_operand.vmem [shape: f32[16,128], index: 8, kind: input, shape index: {}]
  %s9 = inlined_call_operand.vmem [shape: f32[32,256], index: 9, kind: output, shape index: {}]
  %s10 = sld [smem:[#allocation0]]
  $region69: #{mgdn_forward.1} parent=0
    _
  %s12 = ssub.s32 1, %s10
  %s13 = scalar_select 0, %s12, %s10
  loop: start=0, step=1, limit=4
  $region2: #{mgdn_forward.1} parent=0 // loop_pre_header
    _
  $region3: #{mgdn_forward.1} parent=0 // loop_header
    %s15 = sphi 0, %s19
    %p16 = scmp.ge.s32.totalorder %s15, 4
    %s23 = sphi 0, %s23
    %s25 = sphi 0, %s23
    %s26 = sphi 0, %s25
    %s40 = sphi 0, %s26
    %s44 = sphi 0, %s44
    %s46 = sphi 0, %s44
    %s47 = sphi 0, %s46
    %s61 = sphi 0, %s47
    %s65 = sphi 0, %s65
    %s67 = sphi 0, %s65
    %s68 = sphi 0, %s67
    %s82 = sphi 0, %s68
    %s88 = sphi 0, %s90
    %s91 = sphi 0, %s88
    %s92 = sphi 0, %s91
    %s108 = sphi 0, %s92
    %s112 = sphi 0, %s112
    %s114 = sphi 0, %s112
    %s115 = sphi 0, %s114
    %s129 = sphi 0, %s115
    %s133 = sphi 0, %s133
    %s135 = sphi 0, %s133
    %s136 = sphi 0, %s135
    %s150 = sphi 0, %s136
    %s154 = sphi 0, %s154
    %s156 = sphi 0, %s154
    %s157 = sphi 0, %s156
    %s171 = sphi 0, %s157
    %s175 = sphi 0, %s175
    %s177 = sphi 0, %s175
    %s178 = sphi 0, %s177
    %s192 = sphi 0, %s178
    %s196 = sphi 0, %s196
    %s198 = sphi 0, %s196
    %s199 = sphi 0, %s198
    %s213 = sphi 0, %s199
    %s219 = sphi 0, %s221
    %s222 = sphi 0, %s219
    %s223 = sphi 0, %s222
    %s239 = sphi 0, %s223
  $region4: #{mgdn_forward.1} parent=0 // loop_header_branch
    %18 = sbr.rel (%p16) target = $region8
  $region5: #{mgdn_forward.1} parent=0 // loop_body
    %s20 = ssub.s32 %s15, 1
    %s21 = ssub.s32 %s15, 2
    %s22 = sadd.s32 %s15, 1
    %s24 = sadd.s32 %s23, 1
    %p27 = scmp.eq.s32.totalorder %s15, 1
    %p28 = scmp.ne.s32.totalorder %s23, %s25
    %p29 = scmp.eq.s32.totalorder %s15, 0
    %p30 = por %p28, %p29
    %p31 = scmp.ne.s32.totalorder %s23, %s25
    %p32 = scmp.eq.s32.totalorder %s20, 1
    %p33 = por %p31, %p32
    %p34 = scmp.ne.s32.totalorder %s25, %s26
    %p35 = scmp.eq.s32.totalorder %s20, 0
    %p36 = por %p34, %p35
    %p37 = scmp.ne.s32.totalorder %s25, %s26
    %p38 = scmp.eq.s32.totalorder %s21, 1
    %p39 = por %p37, %p38
    %p41 = scmp.ne.s32.totalorder %s26, %s40
    %p42 = scmp.eq.s32.totalorder %s21, 0
    %p43 = por %p41, %p42
    %s45 = sadd.s32 %s44, 1
    %p48 = scmp.eq.s32.totalorder %s15, 1
    %p49 = scmp.ne.s32.totalorder %s44, %s46
    %p50 = scmp.eq.s32.totalorder %s15, 0
    %p51 = por %p49, %p50
    %p52 = scmp.ne.s32.totalorder %s44, %s46
    %p53 = scmp.eq.s32.totalorder %s20, 1
    %p54 = por %p52, %p53
    %p55 = scmp.ne.s32.totalorder %s46, %s47
    %p56 = scmp.eq.s32.totalorder %s20, 0
    %p57 = por %p55, %p56
    %p58 = scmp.ne.s32.totalorder %s46, %s47
    %p59 = scmp.eq.s32.totalorder %s21, 1
    %p60 = por %p58, %p59
    %p62 = scmp.ne.s32.totalorder %s47, %s61
    %p63 = scmp.eq.s32.totalorder %s21, 0
    %p64 = por %p62, %p63
    %s66 = sadd.s32 %s65, 1
    %p69 = scmp.eq.s32.totalorder %s15, 1
    %p70 = scmp.ne.s32.totalorder %s65, %s67
    %p71 = scmp.eq.s32.totalorder %s15, 0
    %p72 = por %p70, %p71
    %p73 = scmp.ne.s32.totalorder %s65, %s67
    %p74 = scmp.eq.s32.totalorder %s20, 1
    %p75 = por %p73, %p74
    %p76 = scmp.ne.s32.totalorder %s67, %s68
    %p77 = scmp.eq.s32.totalorder %s20, 0
    %p78 = por %p76, %p77
    %p79 = scmp.ne.s32.totalorder %s67, %s68
    %p80 = scmp.eq.s32.totalorder %s21, 1
    %p81 = por %p79, %p80
    %p83 = scmp.ne.s32.totalorder %s68, %s82
    %p84 = scmp.eq.s32.totalorder %s21, 0
    %p85 = por %p83, %p84
    %s86 = ssub.s32 %s15, %s22
    %p87 = scmp.eq.s32.totalorder %s86, 0
    %s89 = sadd.s32 %s88, 1
    %s90 = scalar_select %p87, %s88, %s89
    %p93 = pneg %p87
    %p94 = scmp.eq.s32.totalorder %s15, 1
    %p95 = por %p93, %p94
    %p96 = scmp.ne.s32.totalorder %s88, %s91
    %p97 = scmp.eq.s32.totalorder %s15, 0
    %p98 = por %p96, %p97
    %p99 = scmp.ne.s32.totalorder %s88, %s91
    %p100 = scmp.eq.s32.totalorder %s20, 1
    %p101 = por %p99, %p100
    %p102 = scmp.ne.s32.totalorder %s91, %s92
    %p103 = scmp.eq.s32.totalorder %s20, 0
    %p104 = por %p102, %p103
    %p105 = scmp.ne.s32.totalorder %s91, %s92
    %p106 = scmp.eq.s32.totalorder %s21, 1
    %p107 = por %p105, %p106
    %p109 = scmp.ne.s32.totalorder %s92, %s108
    %p110 = scmp.eq.s32.totalorder %s21, 0
    %p111 = por %p109, %p110
    %s113 = sadd.s32 %s112, 1
    %p116 = scmp.eq.s32.totalorder %s15, 1
    %p117 = scmp.ne.s32.totalorder %s112, %s114
    %p118 = scmp.eq.s32.totalorder %s15, 0
    %p119 = por %p117, %p118
    %p120 = scmp.ne.s32.totalorder %s112, %s114
    %p121 = scmp.eq.s32.totalorder %s20, 1
    %p122 = por %p120, %p121
    %p123 = scmp.ne.s32.totalorder %s114, %s115
    %p124 = scmp.eq.s32.totalorder %s20, 0
    %p125 = por %p123, %p124
    %p126 = scmp.ne.s32.totalorder %s114, %s115
    %p127 = scmp.eq.s32.totalorder %s21, 1
    %p128 = por %p126, %p127
    %p130 = scmp.ne.s32.totalorder %s115, %s129
    %p131 = scmp.eq.s32.totalorder %s21, 0
    %p132 = por %p130, %p131
    %s134 = sadd.s32 %s133, 1
    %p137 = scmp.eq.s32.totalorder %s15, 1
    %p138 = scmp.ne.s32.totalorder %s133, %s135
    %p139 = scmp.eq.s32.totalorder %s15, 0
    %p140 = por %p138, %p139
    %p141 = scmp.ne.s32.totalorder %s133, %s135
    %p142 = scmp.eq.s32.totalorder %s20, 1
    %p143 = por %p141, %p142
    %p144 = scmp.ne.s32.totalorder %s135, %s136
    %p145 = scmp.eq.s32.totalorder %s20, 0
    %p146 = por %p144, %p145
    %p147 = scmp.ne.s32.totalorder %s135, %s136
    %p148 = scmp.eq.s32.totalorder %s21, 1
    %p149 = por %p147, %p148
    %p151 = scmp.ne.s32.totalorder %s136, %s150
    %p152 = scmp.eq.s32.totalorder %s21, 0
    %p153 = por %p151, %p152
    %s155 = sadd.s32 %s154, 1
    %p158 = scmp.eq.s32.totalorder %s15, 1
    %p159 = scmp.ne.s32.totalorder %s154, %s156
    %p160 = scmp.eq.s32.totalorder %s15, 0
    %p161 = por %p159, %p160
    %p162 = scmp.ne.s32.totalorder %s154, %s156
    %p163 = scmp.eq.s32.totalorder %s20, 1
    %p164 = por %p162, %p163
    %p165 = scmp.ne.s32.totalorder %s156, %s157
    %p166 = scmp.eq.s32.totalorder %s20, 0
    %p167 = por %p165, %p166
    %p168 = scmp.ne.s32.totalorder %s156, %s157
    %p169 = scmp.eq.s32.totalorder %s21, 1
    %p170 = por %p168, %p169
    %p172 = scmp.ne.s32.totalorder %s157, %s171
    %p173 = scmp.eq.s32.totalorder %s21, 0
    %p174 = por %p172, %p173
    %s176 = sadd.s32 %s175, 1
    %p179 = scmp.eq.s32.totalorder %s15, 1
    %p180 = scmp.ne.s32.totalorder %s175, %s177
    %p181 = scmp.eq.s32.totalorder %s15, 0
    %p182 = por %p180, %p181
    %p183 = scmp.ne.s32.totalorder %s175, %s177
    %p184 = scmp.eq.s32.totalorder %s20, 1
    %p185 = por %p183, %p184
    %p186 = scmp.ne.s32.totalorder %s177, %s178
    %p187 = scmp.eq.s32.totalorder %s20, 0
    %p188 = por %p186, %p187
    %p189 = scmp.ne.s32.totalorder %s177, %s178
    %p190 = scmp.eq.s32.totalorder %s21, 1
    %p191 = por %p189, %p190
    %p193 = scmp.ne.s32.totalorder %s178, %s192
    %p194 = scmp.eq.s32.totalorder %s21, 0
    %p195 = por %p193, %p194
    %s197 = sadd.s32 %s196, 1
    %p200 = scmp.eq.s32.totalorder %s15, 1
    %p201 = scmp.ne.s32.totalorder %s196, %s198
    %p202 = scmp.eq.s32.totalorder %s15, 0
    %p203 = por %p201, %p202
    %p204 = scmp.ne.s32.totalorder %s196, %s198
    %p205 = scmp.eq.s32.totalorder %s20, 1
    %p206 = por %p204, %p205
    %p207 = scmp.ne.s32.totalorder %s198, %s199
    %p208 = scmp.eq.s32.totalorder %s20, 0
    %p209 = por %p207, %p208
    %p210 = scmp.ne.s32.totalorder %s198, %s199
    %p211 = scmp.eq.s32.totalorder %s21, 1
    %p212 = por %p210, %p211
    %p214 = scmp.ne.s32.totalorder %s199, %s213
    %p215 = scmp.eq.s32.totalorder %s21, 0
    %p216 = por %p214, %p215
    %s217 = ssub.s32 %s15, %s22
    %p218 = scmp.eq.s32.totalorder %s217, 0
    %s220 = sadd.s32 %s219, 1
    %s221 = scalar_select %p218, %s219, %s220
    %p224 = pneg %p218
    %p225 = scmp.eq.s32.totalorder %s15, 1
    %p226 = por %p224, %p225
    %p227 = scmp.ne.s32.totalorder %s219, %s222
    %p228 = scmp.eq.s32.totalorder %s15, 0
    %p229 = por %p227, %p228
    %p230 = scmp.ne.s32.totalorder %s219, %s222
    %p231 = scmp.eq.s32.totalorder %s20, 1
    %p232 = por %p230, %p231
    %p233 = scmp.ne.s32.totalorder %s222, %s223
    %p234 = scmp.eq.s32.totalorder %s20, 0
    %p235 = por %p233, %p234
    %p236 = scmp.ne.s32.totalorder %s222, %s223
    %p237 = scmp.eq.s32.totalorder %s21, 1
    %p238 = por %p236, %p237
    %p240 = scmp.ne.s32.totalorder %s223, %s239
    %p241 = scmp.eq.s32.totalorder %s21, 0
    %p242 = por %p240, %p241
    %p243 = scmp.le.s32.totalorder 1, %s15
    %p244 = scmp.lt.s32.totalorder %s15, 3
    %p245 = pnand %p243, %p244
    %p246 = pneg %p245
    // Predicated region
    $region9: #{mgdn_forward.1} parent=5 // pred_check
      _
    $region10: #{mgdn_forward.1} parent=5 // pred_check_branch
      %248 = sbr.rel (%p245) target = $region12
    $region11: #{mgdn_forward.1} parent=5 // pred_region
      %s249 = ssub.s32 %s15, 1
      // Predicated region
      $region13: #{mgdn_forward.1} parent=11 // pred_check
        %p250 = pneg %p36
      $region14: #{mgdn_forward.1} parent=11 // pred_check_branch
        %252 = sbr.rel (%p250) target = $region16
      $region15: #{mgdn_forward.1} parent=11 // pred_region
        _
      $region16: #{mgdn_forward.1} parent=11 // pred_fallthru
        _
      // Predicated region
      $region17: #{mgdn_forward.1} parent=11 // pred_check
        %p253 = pneg %p57
      $region18: #{mgdn_forward.1} parent=11 // pred_check_branch
        %255 = sbr.rel (%p253) target = $region20
      $region19: #{mgdn_forward.1} parent=11 // pred_region
        _
      $region20: #{mgdn_forward.1} parent=11 // pred_fallthru
        _
      // Predicated region
      $region21: #{mgdn_forward.1} parent=11 // pred_check
        %p256 = pneg %p78
      $region22: #{mgdn_forward.1} parent=11 // pred_check_branch
        %258 = sbr.rel (%p256) target = $region24
      $region23: #{mgdn_forward.1} parent=11 // pred_region
        _
      $region24: #{mgdn_forward.1} parent=11 // pred_fallthru
        _
      // Predicated region
      $region25: #{mgdn_forward.1} parent=11 // pred_check
        %p259 = pneg %p125
      $region26: #{mgdn_forward.1} parent=11 // pred_check_branch
        %261 = sbr.rel (%p259) target = $region28
      $region27: #{mgdn_forward.1} parent=11 // pred_region
        _
      $region28: #{mgdn_forward.1} parent=11 // pred_fallthru
        _
      // Predicated region
      $region29: #{mgdn_forward.1} parent=11 // pred_check
        %p262 = pneg %p146
      $region30: #{mgdn_forward.1} parent=11 // pred_check_branch
        %264 = sbr.rel (%p262) target = $region32
      $region31: #{mgdn_forward.1} parent=11 // pred_region
        _
      $region32: #{mgdn_forward.1} parent=11 // pred_fallthru
        _
      // Predicated region
      $region33: #{mgdn_forward.1} parent=11 // pred_check
        %p265 = pneg %p167
      $region34: #{mgdn_forward.1} parent=11 // pred_check_branch
        %267 = sbr.rel (%p265) target = $region36
      $region35: #{mgdn_forward.1} parent=11 // pred_region
        _
      $region36: #{mgdn_forward.1} parent=11 // pred_fallthru
        _
      // Predicated region
      $region37: #{mgdn_forward.1} parent=11 // pred_check
        %p268 = pneg %p188
      $region38: #{mgdn_forward.1} parent=11 // pred_check_branch
        %270 = sbr.rel (%p268) target = $region40
      $region39: #{mgdn_forward.1} parent=11 // pred_region
        _
      $region40: #{mgdn_forward.1} parent=11 // pred_fallthru
        _
      // Predicated region
      $region41: #{mgdn_forward.1} parent=11 // pred_check
        %p271 = pneg %p209
      $region42: #{mgdn_forward.1} parent=11 // pred_check_branch
        %273 = sbr.rel (%p271) target = $region44
      $region43: #{mgdn_forward.1} parent=11 // pred_region
        _
      $region44: #{mgdn_forward.1} parent=11 // pred_fallthru
        _
    $region12: #{mgdn_forward.1} parent=5 // pred_fallthru
      _
    %p274 = scmp.lt.s32.totalorder %s15, 2
    // Predicated region
    $region45: #{mgdn_forward.1} parent=5 // pred_check
      %p275 = pneg %p274
    $region46: #{mgdn_forward.1} parent=5 // pred_check_branch
      %277 = sbr.rel (%p275) target = $region48
    $region47: #{mgdn_forward.1} parent=5 // pred_region
      // Predicated region
      $region49: #{mgdn_forward.1} parent=47 // pred_check
        %p278 = pneg %p98
      $region50: #{mgdn_forward.1} parent=47 // pred_check_branch
        %280 = sbr.rel (%p278) target = $region52
      $region51: #{mgdn_forward.1} parent=47 // pred_region
        %s281 = smul.u32 2, %s15
        %p282 = scmp.lt.s32.totalorder %s281, 3
        %s283 = scalar_select %p282, %s281, 3
        %s284 = smul.addr %s283, 4
        %s285 = scalar_lea.vmem %s3, %s284
        %s286 = smul.u32 2, %s15
      $region52: #{mgdn_forward.1} parent=47 // pred_fallthru
        _
    $region48: #{mgdn_forward.1} parent=5 // pred_fallthru
      _
    %p287 = scmp.le.s32.totalorder 1, %s15
    %p288 = scmp.lt.s32.totalorder %s15, 3
    %p289 = pnand %p287, %p288
    %p290 = pneg %p289
    // Predicated region
    $region53: #{mgdn_forward.1} parent=5 // pred_check
      _
    $region54: #{mgdn_forward.1} parent=5 // pred_check_branch
      %292 = sbr.rel (%p289) target = $region56
    $region55: #{mgdn_forward.1} parent=5 // pred_region
      %s293 = ssub.s32 %s15, 1
      %p294 = pneg %p36
      %p295 = pneg %p33
      %p296 = pneg %p57
      %p297 = pneg %p54
      %p298 = pneg %p78
      %p299 = pneg %p75
      %s300 = smul.u32 2, %s20
      %p301 = scmp.lt.s32.totalorder %s300, 3
      %s302 = scalar_select %p301, %s300, 3
      %s303 = smul.addr %s302, 4
      %s304 = scalar_lea.vmem %s3, %s303
      %p305 = pneg %p104
      %p306 = pneg %p101
      %p307 = pneg %p125
      %p308 = pneg %p122
      %p309 = pneg %p146
      %p310 = pneg %p143
      %p311 = pneg %p167
      %p312 = pneg %p164
      %p313 = pneg %p188
      %p314 = pneg %p185
      %p315 = pneg %p209
      %p316 = pneg %p206
      %p317 = pneg %p235
      %p318 = pneg %p232
      %s319 = smul.u32 2, %s20
      %p320 = scmp.lt.s32.totalorder %s319, 3
      %s321 = scalar_select %p320, %s319, 3
      %s322 = smul.addr %s321, 2
      %s323 = smul.addr %s322, 8
      %s324 = scalar_lea.vmem %s9, %s323
      %s325 = smul.u32 2, %s20
      %p326 = scmp.lt.s32.totalorder %s325, 3
      %s327 = scalar_select %p326, %s325, 3
      %s328 = smul.addr %s327, 4
      %s329 = scalar_lea.vmem %s3, %s328
      %s330 = smul.u32 2, %s20
      %s331 = smul.u32 2, %s20
      %p332 = scmp.lt.s32.totalorder %s331, 3
      %s333 = scalar_select %p332, %s331, 3
      %s334 = smul.addr %s333, 2
      %s335 = smul.addr %s334, 8
      %s336 = scalar_lea.vmem %s9, %s335
      %s337 = smul.u32 2, %s20
      %v339 = vld [vmem:[%s8] sm:$0xff]
      %v340 = vld [vmem:[%s8 + $0x8] sm:$0xff]
      %v341 = vld [vmem:[%s4] sm:$0xf]
      %v342 = vld [vmem:[%s4 + $0x4] sm:$0xf]
      %v343 = vld [vmem:[%s4 + $0x8] sm:$0xf]
      %v344 = vld [vmem:[%s4 + $0xc] sm:$0xf]
      %v345 = vld [vmem:[%s4 + $0x10] sm:$0xf]
      %v346 = vld [vmem:[%s4 + $0x14] sm:$0xf]
      %v347 = vld [vmem:[%s4 + $0x18] sm:$0xf]
      %v348 = vld [vmem:[%s4 + $0x1c] sm:$0x3]
      %v349 = vld [vmem:[%s4 + $0x20] sm:$0xf]
      %v350 = vld [vmem:[%s4 + $0x24] sm:$0xf]
      %v351 = vld [vmem:[%s4 + $0x28] sm:$0xf]
      %v352 = vld [vmem:[%s4 + $0x2c] sm:$0xf]
      %v353 = vld [vmem:[%s4 + $0x30] sm:$0xf]
      %v354 = vld [vmem:[%s4 + $0x34] sm:$0xf]
      %v355 = vld [vmem:[%s4 + $0x38] sm:$0xf]
      %v356 = vld [vmem:[%s4 + $0x3c] sm:$0xf]
      %v357 = vld [vmem:[%s4 + $0x40] sm:$0xf]
      %v358 = vld [vmem:[%s4 + $0x44] sm:$0xf]
      %v359 = vld [vmem:[%s4 + $0x48] sm:$0xf]
      %v360 = vld [vmem:[%s4 + $0x4c] sm:$0xf]
      %v361 = vld [vmem:[%s4 + $0x50] sm:$0xf]
      %v362 = vld [vmem:[%s4 + $0x54] sm:$0xf]
      %v363 = vld [vmem:[%s4 + $0x58] sm:$0xf]
      %v364 = vld [vmem:[%s4 + $0x5c] sm:$0xf]
      %v365 = vld [vmem:[%s4 + $0x60] sm:$0xf]
      %v366 = vld [vmem:[%s4 + $0x64] sm:$0xf]
      %v367 = vld [vmem:[%s4 + $0x68] sm:$0xf]
      %v368 = vld [vmem:[%s4 + $0x6c] sm:$0xf]
      %v369 = vld [vmem:[%s4 + $0x70] sm:$0xf]
      %v370 = vld [vmem:[%s4 + $0x74] sm:$0xf]
      %v371 = vld [vmem:[%s4 + $0x78] sm:$0xf]
      %v372 = vld [vmem:[%s4 + $0x7c] sm:$0xf]
      %v373 = vld [vmem:[%s4 + $0x80] sm:$0xf]
      %v374 = vld [vmem:[%s4 + $0x84] sm:$0xf]
      %v375 = vld [vmem:[%s4 + $0x88] sm:$0xf]
      %v376 = vld [vmem:[%s4 + $0x8c] sm:$0xf]
      %v377 = vld [vmem:[%s4 + $0x90] sm:$0xf]
      %v378 = vld [vmem:[%s4 + $0x94] sm:$0x3]
      %v379 = vld [vmem:[%s4 + $0x98] sm:$0xf]
      %v380 = vld [vmem:[%s4 + $0x9c] sm:$0xf]
      %v381 = vld [vmem:[%s4 + $0xa0] sm:$0xf]
      %v382 = vld [vmem:[%s4 + $0xa4] sm:$0xf]
      %v383 = vld [vmem:[%s4 + $0xa8] sm:$0xf]
      %v384 = vld [vmem:[%s4 + $0xac] sm:$0xf]
      %v385 = vld [vmem:[%s4 + $0xb0] sm:$0xf]
      %v386 = vld [vmem:[%s4 + $0xb4] sm:$0xf]
      %v387 = vld [vmem:[%s4 + $0xb8] sm:$0xf]
      %v388 = vld [vmem:[%s4 + $0xbc] sm:$0xf]
      %v389 = vld [vmem:[%s4 + $0xc0] sm:$0xf]
      %v390 = vld [vmem:[%s4 + $0xc4] sm:$0xf]
      %v391 = vld [vmem:[%s4 + $0xc8] sm:$0xf]
      %v392 = vld [vmem:[%s4 + $0xcc] sm:$0xf]
      %v393 = vld [vmem:[%s4 + $0xd0] sm:$0xf]
      %v394 = vld [vmem:[%s4 + $0xd4] sm:$0xf]
      %v395 = vld [vmem:[%s0] sm:$0xf]
      %v396 = vld [vmem:[%s0 + $0x4] sm:$0xf]
      %v397 = vld [vmem:[%s1] sm:$0xf]
      %v398 = vld [vmem:[%s1 + $0x4] sm:$0xf]
      %v399 = vld [vmem:[%s2] sm:$0xf]
      %v400 = vld [vmem:[%s2 + $0x4] sm:$0xf]
      %v401 = vld [vmem:[%s329] sm:$0xf]
      %v402 = vld [vmem:[%s329 + $0x4] sm:$0xf]
      %v405 = vunpack.c.l.b16 %v401
      %v406 = vunpack.c.l.b16 %v402
      %v407 = vpack.c.b16 %v406, %v405
      %v416 = vunpack.c.l.b16 %v341
      %v417 = vunpack.c.l.b16 %v342
      %v418 = vunpack.c.l.b16 %v343
      %v419 = vunpack.c.l.b16 %v344
      %v420 = vunpack.c.l.b16 %v345
      %v421 = vunpack.c.l.b16 %v346
      %v422 = vunpack.c.l.b16 %v347
      %v423 = vunpack.c.l.b16 %v348
      %v424 = vpack.c.b16 %v417, %v416
      %v425 = vpack.c.b16 %v419, %v418
      %v426 = vpack.c.b16 %v421, %v420
      %v427 = vpack.c.b16 %v423, %v422
      %vm431 = vcmask 490496
      %v433 = vsel %vm431, %v407, 0
      %vm435 = vcmask 1045504
      %v437 = vsel %vm435, %v427, 0
      %439 = vmatprep.subr.bf16.mxu0 0
      %440 = vmatpush1.bf16.msra.mxu0 0
      %441 = vmatprep.subr.bf16.mxu0 0
      %442 = vmatpush1.bf16.msra.mxu0 0
      %443 = vmatprep.subr.bf16.mxu0 0
      %444 = vmatpush1.bf16.msra.mxu0 0
      %445 = vmatprep.subr.bf16.mxu0 0
      %446 = vmatpush1.bf16.msra.mxu0 0
      %447 = vmatprep.subr.bf16.mxu0 0
      %448 = vmatpush1.bf16.msra.mxu0 %v437
      %449 = vmatprep.subr.bf16.mxu0 0
      %450 = vmatpush1.bf16.msra.mxu0 %v426
      %451 = vmatprep.subr.bf16.mxu0 0
      %452 = vmatpush1.bf16.msra.mxu0 %v425
      %453 = vmatprep.subr.bf16.mxu0 0
      %454 = vmatpush1.bf16.msra.mxu0 %v424
      %455 = vmatprep.subr.bf16.mxu0 0
      %456 = vmatpush2.bf16.msra.mxu0 0
      %457 = vmatprep.subr.bf16.mxu0 0
      %458 = vmatpush2.bf16.msra.mxu0 0
      %459 = vmatprep.subr.bf16.mxu0 0
      %460 = vmatpush2.bf16.msra.mxu0 0
      %461 = vmatprep.subr.bf16.mxu0 0
      %462 = vmatpush2.bf16.msra.mxu0 0
      %463 = vmatprep.subr.bf16.mxu0 0
      %464 = vmatpush2.bf16.msra.mxu0 0
      %465 = vmatprep.subr.bf16.mxu0 0
      %466 = vmatpush2.bf16.msra.mxu0 0
      %467 = vmatprep.subr.bf16.mxu0 0
      %468 = vmatpush2.bf16.msra.mxu0 0
      %469 = vmatprep.subr.bf16.mxu0 0
      %470 = vmatpush2.bf16.msra.mxu0 0
      %471 = vmatprep.mubr.bf16.mxu0 0
      %472 = vmatmul.mubr.bf16.gmra.mxu0 %v433
      %v473 = vpop.f32.mrf.mxu0
      %v474 = vadd.f32 0.0, %v473
      %v475 = vpop.f32.mrf.mxu0
      %v476 = vpop.f32.mrf.mxu0
      %v477 = vadd.f32 0.0, %v476
      %v478 = vpop.f32.mrf.mxu0
      %479 = vdwg.mxu0
      %v480 = vpack.c.bf16 %v477, %v474
      %v481 = vlaneseq
      %v482 = vshrl.u32 %v481, 7
      %v483 = vsub.s32 0, %v482
      %v484 = vrot.slane %v339, %v483
      %v487 = vunpack.c.l.b16 %v395
      %v488 = vunpack.c.l.b16 %v396
      %v489 = vpack.c.b16 %v488, %v487
      %vm490 = vcmask 130048
      %v492 = vsel %vm490, %v489, 0
      %494 = vmatprep.subr.bf16.mxu0 0
      %495 = vmatpush1.bf16.msra.mxu0 0
      %496 = vmatprep.subr.bf16.mxu0 0
      %497 = vmatpush1.bf16.msra.mxu0 0
      %498 = vmatprep.subr.bf16.mxu0 0
      %499 = vmatpush1.bf16.msra.mxu0 0
      %500 = vmatprep.subr.bf16.mxu0 0
      %501 = vmatpush1.bf16.msra.mxu0 0
      %502 = vmatprep.subr.bf16.mxu0 0
      %503 = vmatpush1.bf16.msra.mxu0 0
      %504 = vmatprep.subr.bf16.mxu0 0
      %505 = vmatpush1.bf16.msra.mxu0 0
      %506 = vmatprep.subr.bf16.mxu0 0
      %507 = vmatpush1.bf16.msra.mxu0 0
      %508 = vmatprep.subr.bf16.mxu0 0
      %509 = vmatpush1.bf16.msra.mxu0 %v480
      %510 = vmatprep.subr.bf16.mxu0 0
      %511 = vmatpush2.bf16.msra.mxu0 0
      %512 = vmatprep.subr.bf16.mxu0 0
      %513 = vmatpush2.bf16.msra.mxu0 0
      %514 = vmatprep.subr.bf16.mxu0 0
      %515 = vmatpush2.bf16.msra.mxu0 0
      %516 = vmatprep.subr.bf16.mxu0 0
      %517 = vmatpush2.bf16.msra.mxu0 0
      %518 = vmatprep.subr.bf16.mxu0 0
      %519 = vmatpush2.bf16.msra.mxu0 0
      %520 = vmatprep.subr.bf16.mxu0 0
      %521 = vmatpush2.bf16.msra.mxu0 0
      %522 = vmatprep.subr.bf16.mxu0 0
      %523 = vmatpush2.bf16.msra.mxu0 0
      %524 = vmatprep.subr.bf16.mxu0 0
      %525 = vmatpush2.bf16.msra.mxu0 0
      %526 = vmatprep.mubr.bf16.mxu0 0
      %527 = vmatmul.mubr.bf16.gmra.mxu0 %v492
      %v528 = vpop.f32.mrf.mxu0
      %v529 = vadd.f32 %v484, %v528
      %v530 = vpop.f32.mrf.mxu0
      %v531 = vpop.f32.mrf.mxu0
      %v532 = vadd.f32 %v484, %v531
      %v533 = vpop.f32.mrf.mxu0
      %534 = vdwg.mxu0
      %v535 = vmax.f32 %v529, 0.0
      %v536 = vmax.f32 %v532, 0.0
      %v537 = vpack.c.bf16 %v536, %v535
      %v540 = vunpack.c.l.b16 %v349
      %v541 = vunpack.c.l.b16 %v350
      %v542 = vpack.c.b16 %v541, %v540
      %v545 = vsel %vm490, %v537, 0
      %547 = vmatprep.subr.bf16.mxu0 0
      %548 = vmatpush1.bf16.msra.mxu0 0
      %549 = vmatprep.subr.bf16.mxu0 0
      %550 = vmatpush1.bf16.msra.mxu0 0
      %551 = vmatprep.subr.bf16.mxu0 0
      %552 = vmatpush1.bf16.msra.mxu0 0
      %553 = vmatprep.subr.bf16.mxu0 0
      %554 = vmatpush1.bf16.msra.mxu0 0
      %555 = vmatprep.subr.bf16.mxu0 0
      %556 = vmatpush1.bf16.msra.mxu0 0
      %557 = vmatprep.subr.bf16.mxu0 0
      %558 = vmatpush1.bf16.msra.mxu0 0
      %559 = vmatprep.subr.bf16.mxu0 0
      %560 = vmatpush1.bf16.msra.mxu0 0
      %561 = vmatprep.subr.bf16.mxu0 0
      %562 = vmatpush1.bf16.msra.mxu0 %v542
      %563 = vmatprep.subr.bf16.mxu0 0
      %564 = vmatpush2.bf16.msra.mxu0 0
      %565 = vmatprep.subr.bf16.mxu0 0
      %566 = vmatpush2.bf16.msra.mxu0 0
      %567 = vmatprep.subr.bf16.mxu0 0
      %568 = vmatpush2.bf16.msra.mxu0 0
      %569 = vmatprep.subr.bf16.mxu0 0
      %570 = vmatpush2.bf16.msra.mxu0 0
      %571 = vmatprep.subr.bf16.mxu0 0
      %572 = vmatpush2.bf16.msra.mxu0 0
      %573 = vmatprep.subr.bf16.mxu0 0
      %574 = vmatpush2.bf16.msra.mxu0 0
      %575 = vmatprep.subr.bf16.mxu0 0
      %576 = vmatpush2.bf16.msra.mxu0 0
      %577 = vmatprep.subr.bf16.mxu0 0
      %578 = vmatpush2.bf16.msra.mxu0 0
      %579 = vmatprep.mubr.bf16.mxu0 0
      %580 = vmatmul.mubr.bf16.gmra.mxu0 %v545
      %v581 = vpop.f32.mrf.mxu0
      %v582 = vadd.f32 0.0, %v581
      %v583 = vpop.f32.mrf.mxu0
      %v584 = vpop.f32.mrf.mxu0
      %v585 = vadd.f32 0.0, %v584
      %v586 = vpop.f32.mrf.mxu0
      %587 = vdwg.mxu0
      %v588 = vpack.c.bf16 %v585, %v582
      %v589 = vlaneseq
      %v590 = vshrl.u32 %v589, 7
      %v591 = vsub.s32 1, %v590
      %v592 = vrot.slane %v339, %v591
      %593 = vmatprep.subr.bf16.mxu0 0
      %594 = vmatpush1.bf16.msra.mxu0 0
      %595 = vmatprep.subr.bf16.mxu0 0
      %596 = vmatpush1.bf16.msra.mxu0 0
      %597 = vmatprep.subr.bf16.mxu0 0
      %598 = vmatpush1.bf16.msra.mxu0 0
      %599 = vmatprep.subr.bf16.mxu0 0
      %600 = vmatpush1.bf16.msra.mxu0 0
      %601 = vmatprep.subr.bf16.mxu0 0
      %602 = vmatpush1.bf16.msra.mxu0 0
      %603 = vmatprep.subr.bf16.mxu0 0
      %604 = vmatpush1.bf16.msra.mxu0 0
      %605 = vmatprep.subr.bf16.mxu0 0
      %606 = vmatpush1.bf16.msra.mxu0 0
      %607 = vmatprep.subr.bf16.mxu0 0
      %608 = vmatpush1.bf16.msra.mxu0 %v588
      %609 = vmatprep.subr.bf16.mxu0 0
      %610 = vmatpush2.bf16.msra.mxu0 0
      %611 = vmatprep.subr.bf16.mxu0 0
      %612 = vmatpush2.bf16.msra.mxu0 0
      %613 = vmatprep.subr.bf16.mxu0 0
      %614 = vmatpush2.bf16.msra.mxu0 0
      %615 = vmatprep.subr.bf16.mxu0 0
      %616 = vmatpush2.bf16.msra.mxu0 0
      %617 = vmatprep.subr.bf16.mxu0 0
      %618 = vmatpush2.bf16.msra.mxu0 0
      %619 = vmatprep.subr.bf16.mxu0 0
      %620 = vmatpush2.bf16.msra.mxu0 0
      %621 = vmatprep.subr.bf16.mxu0 0
      %622 = vmatpush2.bf16.msra.mxu0 0
      %623 = vmatprep.subr.bf16.mxu0 0
      %624 = vmatpush2.bf16.msra.mxu0 0
      %625 = vmatprep.mubr.bf16.mxu0 0
      %626 = vmatmul.mubr.bf16.gmra.mxu0 %v492
      %v627 = vpop.f32.mrf.mxu0
      %v628 = vadd.f32 %v592, %v627
      %v629 = vpop.f32.mrf.mxu0
      %v630 = vpop.f32.mrf.mxu0
      %v631 = vadd.f32 %v592, %v630
      %v632 = vpop.f32.mrf.mxu0
      %633 = vdwg.mxu0
      %vm634 = vcmask 523264
      %v635 = vsel %vm634, %v628, -inf
      %636 = vmax.xlane.f32.xlu0 %v635
      %v637 = vpop.xlane.xlu0 %636
      %v638 = vsel %vm634, %v631, -inf
      %639 = vmax.xlane.f32.xlu0 %v638
      %v640 = vpop.xlane.xlu0 %639
      %v641 = vsub.f32 %v628, %v637
      %v642 = vsub.f32 %v631, %v640
      %v643 = vmul.f32 %v641, 1.442695
      %v644 = vpow.pop %v643
      %v645 = vmul.f32 %v642, 1.442695
      %v646 = vpow.pop %v645
      %v647 = vsel %vm634, %v644, 0.0
      %648 = vadd.xlane.f32.xlu0 %v647
      %v649 = vpop.xlane.xlu0 %648
      %v650 = vsel %vm634, %v646, 0.0
      %651 = vadd.xlane.f32.xlu0 %v650
      %v652 = vpop.xlane.xlu0 %651
      %v653 = vlog2.pop %v649
      %v654 = vmul.f32 %v653, 0.6931472
      %v655 = vlog2.pop %v652
      %v656 = vmul.f32 %v655, 0.6931472
      %v657 = vadd.f32 %v637, %v654
      %v658 = vadd.f32 %v640, %v656
      %v659 = vsub.f32 %v628, %v657
      %v660 = vsub.f32 %v631, %v658
      %v661 = vld [vmem:[%s5] sm:$0xff]
      %v662 = vld [vmem:[%s5 + $0x8] sm:$0xff]
      %v663 = vmul.f32 %v659, %v661
      %v664 = vmul.f32 %v660, %v662
      %v665 = vlaneseq
      %v666 = vshrl.u32 %v665, 7
      %v667 = vsub.s32 6, %v666
      %v668 = vrot.slane %v339, %v667
      %v669 = vadd.f32 %v663, %v668
      %v670 = vadd.f32 %v664, %v668
      %v671 = vmax.f32 %v669, 0.0
      %v672 = vmax.f32 %v670, 0.0
      %v673 = vpack.c.bf16 %v672, %v671
      %v674 = vlaneseq
      %v675 = vshrl.u32 %v674, 7
      %v676 = vsub.s32 7, %v675
      %v677 = vrot.slane %v339, %v676
      %v686 = vunpack.c.l.b16 %v363
      %v687 = vunpack.c.l.b16 %v364
      %v688 = vunpack.c.l.b16 %v365
      %v689 = vunpack.c.l.b16 %v366
      %v690 = vunpack.c.l.b16 %v367
      %v691 = vunpack.c.l.b16 %v368
      %v692 = vunpack.c.l.b16 %v369
      %v693 = vunpack.c.l.b16 %v370
      %v694 = vpack.c.b16 %v687, %v686
      %v695 = vpack.c.b16 %v689, %v688
      %v696 = vpack.c.b16 %v691, %v690
      %v697 = vpack.c.b16 %v693, %v692
      %v703 = vsel %vm634, %v673, 0
      %705 = vmatprep.subr.bf16.mxu0 0
      %706 = vmatpush1.bf16.msra.mxu0 0
      %707 = vmatprep.subr.bf16.mxu0 0
      %708 = vmatpush1.bf16.msra.mxu0 0
      %709 = vmatprep.subr.bf16.mxu0 0
      %710 = vmatpush1.bf16.msra.mxu0 0
      %711 = vmatprep.subr.bf16.mxu0 0
      %712 = vmatpush1.bf16.msra.mxu0 0
      %713 = vmatprep.subr.bf16.mxu0 0
      %714 = vmatpush1.bf16.msra.mxu0 %v697
      %715 = vmatprep.subr.bf16.mxu0 0
      %716 = vmatpush1.bf16.msra.mxu0 %v696
      %717 = vmatprep.subr.bf16.mxu0 0
      %718 = vmatpush1.bf16.msra.mxu0 %v695
      %719 = vmatprep.subr.bf16.mxu0 0
      %720 = vmatpush1.bf16.msra.mxu0 %v694
      %721 = vmatprep.subr.bf16.mxu0 0
      %722 = vmatpush2.bf16.msra.mxu0 0
      %723 = vmatprep.subr.bf16.mxu0 0
      %724 = vmatpush2.bf16.msra.mxu0 0
      %725 = vmatprep.subr.bf16.mxu0 0
      %726 = vmatpush2.bf16.msra.mxu0 0
      %727 = vmatprep.subr.bf16.mxu0 0
      %728 = vmatpush2.bf16.msra.mxu0 0
      %729 = vmatprep.subr.bf16.mxu0 0
      %730 = vmatpush2.bf16.msra.mxu0 0
      %731 = vmatprep.subr.bf16.mxu0 0
      %732 = vmatpush2.bf16.msra.mxu0 0
      %733 = vmatprep.subr.bf16.mxu0 0
      %734 = vmatpush2.bf16.msra.mxu0 0
      %735 = vmatprep.subr.bf16.mxu0 0
      %736 = vmatpush2.bf16.msra.mxu0 0
      %737 = vmatprep.mubr.bf16.mxu0 0
      %738 = vmatmul.mubr.bf16.gmra.mxu0 %v703
      %v739 = vpop.f32.mrf.mxu0
      %v740 = vadd.f32 %v677, %v739
      %v741 = vpop.f32.mrf.mxu0
      %v742 = vpop.f32.mrf.mxu0
      %v743 = vadd.f32 %v677, %v742
      %v744 = vpop.f32.mrf.mxu0
      %745 = vdwg.mxu0
      %v746 = vpack.c.bf16 %v743, %v740
      %v755 = vunpack.c.l.b16 %v351
      %v756 = vunpack.c.l.b16 %v352
      %v757 = vunpack.c.l.b16 %v353
      %v758 = vunpack.c.l.b16 %v354
      %v759 = vunpack.c.l.b16 %v355
      %v760 = vunpack.c.l.b16 %v356
      %v761 = vunpack.c.l.b16 %v357
      %v762 = vunpack.c.l.b16 %v358
      %v763 = vpack.c.b16 %v756, %v755
      %v764 = vpack.c.b16 %v758, %v757
      %v765 = vpack.c.b16 %v760, %v759
      %v766 = vpack.c.b16 %v762, %v761
      %v772 = vsel %vm634, %v746, 0
      %774 = vmatprep.subr.bf16.mxu0 0
      %775 = vmatpush1.bf16.msra.mxu0 0
      %776 = vmatprep.subr.bf16.mxu0 0
      %777 = vmatpush1.bf16.msra.mxu0 0
      %778 = vmatprep.subr.bf16.mxu0 0
      %779 = vmatpush1.bf16.msra.mxu0 0
      %780 = vmatprep.subr.bf16.mxu0 0
      %781 = vmatpush1.bf16.msra.mxu0 0
      %782 = vmatprep.subr.bf16.mxu0 0
      %783 = vmatpush1.bf16.msra.mxu0 %v766
      %784 = vmatprep.subr.bf16.mxu0 0
      %785 = vmatpush1.bf16.msra.mxu0 %v765
      %786 = vmatprep.subr.bf16.mxu0 0
      %787 = vmatpush1.bf16.msra.mxu0 %v764
      %788 = vmatprep.subr.bf16.mxu0 0
      %789 = vmatpush1.bf16.msra.mxu0 %v763
      %790 = vmatprep.subr.bf16.mxu0 0
      %791 = vmatpush2.bf16.msra.mxu0 0
      %792 = vmatprep.subr.bf16.mxu0 0
      %793 = vmatpush2.bf16.msra.mxu0 0
      %794 = vmatprep.subr.bf16.mxu0 0
      %795 = vmatpush2.bf16.msra.mxu0 0
      %796 = vmatprep.subr.bf16.mxu0 0
      %797 = vmatpush2.bf16.msra.mxu0 0
      %798 = vmatprep.subr.bf16.mxu0 0
      %799 = vmatpush2.bf16.msra.mxu0 0
      %800 = vmatprep.subr.bf16.mxu0 0
      %801 = vmatpush2.bf16.msra.mxu0 0
      %802 = vmatprep.subr.bf16.mxu0 0
      %803 = vmatpush2.bf16.msra.mxu0 0
      %804 = vmatprep.subr.bf16.mxu0 0
      %805 = vmatpush2.bf16.msra.mxu0 0
      %806 = vmatprep.mubr.bf16.mxu0 0
      %807 = vmatmul.mubr.bf16.gmra.mxu0 %v772
      %v808 = vpop.f32.mrf.mxu0
      %v809 = vadd.f32 0.0, %v808
      %v810 = vpop.f32.mrf.mxu0
      %v811 = vpop.f32.mrf.mxu0
      %v812 = vadd.f32 0.0, %v811
      %v813 = vpop.f32.mrf.mxu0
      %814 = vdwg.mxu0
      %v815 = vpack.c.bf16 %v812, %v809
      %v816 = vlaneseq
      %v817 = vshrl.u32 %v816, 7
      %v818 = vsub.s32 2, %v817
      %v819 = vrot.slane %v339, %v818
      %v822 = vunpack.c.l.b16 %v397
      %v823 = vunpack.c.l.b16 %v398
      %v824 = vpack.c.b16 %v823, %v822
      %v826 = vsel %vm490, %v824, 0
      %828 = vmatprep.subr.bf16.mxu0 0
      %829 = vmatpush1.bf16.msra.mxu0 0
      %830 = vmatprep.subr.bf16.mxu0 0
      %831 = vmatpush1.bf16.msra.mxu0 0
      %832 = vmatprep.subr.bf16.mxu0 0
      %833 = vmatpush1.bf16.msra.mxu0 0
      %834 = vmatprep.subr.bf16.mxu0 0
      %835 = vmatpush1.bf16.msra.mxu0 0
      %836 = vmatprep.subr.bf16.mxu0 0
      %837 = vmatpush1.bf16.msra.mxu0 0
      %838 = vmatprep.subr.bf16.mxu0 0
      %839 = vmatpush1.bf16.msra.mxu0 0
      %840 = vmatprep.subr.bf16.mxu0 0
      %841 = vmatpush1.bf16.msra.mxu0 0
      %842 = vmatprep.subr.bf16.mxu0 0
      %843 = vmatpush1.bf16.msra.mxu0 %v815
      %844 = vmatprep.subr.bf16.mxu0 0
      %845 = vmatpush2.bf16.msra.mxu0 0
      %846 = vmatprep.subr.bf16.mxu0 0
      %847 = vmatpush2.bf16.msra.mxu0 0
      %848 = vmatprep.subr.bf16.mxu0 0
      %849 = vmatpush2.bf16.msra.mxu0 0
      %850 = vmatprep.subr.bf16.mxu0 0
      %851 = vmatpush2.bf16.msra.mxu0 0
      %852 = vmatprep.subr.bf16.mxu0 0
      %853 = vmatpush2.bf16.msra.mxu0 0
      %854 = vmatprep.subr.bf16.mxu0 0
      %855 = vmatpush2.bf16.msra.mxu0 0
      %856 = vmatprep.subr.bf16.mxu0 0
      %857 = vmatpush2.bf16.msra.mxu0 0
      %858 = vmatprep.subr.bf16.mxu0 0
      %859 = vmatpush2.bf16.msra.mxu0 0
      %860 = vmatprep.mubr.bf16.mxu0 0
      %861 = vmatmul.mubr.bf16.gmra.mxu0 %v826
      %v862 = vpop.f32.mrf.mxu0
      %v863 = vadd.f32 %v819, %v862
      %v864 = vpop.f32.mrf.mxu0
      %v865 = vpop.f32.mrf.mxu0
      %v866 = vadd.f32 %v819, %v865
      %v867 = vpop.f32.mrf.mxu0
      %868 = vdwg.mxu0
      %v869 = vmax.f32 %v863, 0.0
      %v870 = vmax.f32 %v866, 0.0
      %v871 = vpack.c.bf16 %v870, %v869
      %v874 = vunpack.c.l.b16 %v359
      %v875 = vunpack.c.l.b16 %v360
      %v876 = vpack.c.b16 %v875, %v874
      %v879 = vsel %vm490, %v871, 0
      %881 = vmatprep.subr.bf16.mxu0 0
      %882 = vmatpush1.bf16.msra.mxu0 0
      %883 = vmatprep.subr.bf16.mxu0 0
      %884 = vmatpush1.bf16.msra.mxu0 0
      %885 = vmatprep.subr.bf16.mxu0 0
      %886 = vmatpush1.bf16.msra.mxu0 0
      %887 = vmatprep.subr.bf16.mxu0 0
      %888 = vmatpush1.bf16.msra.mxu0 0
      %889 = vmatprep.subr.bf16.mxu0 0
      %890 = vmatpush1.bf16.msra.mxu0 0
      %891 = vmatprep.subr.bf16.mxu0 0
      %892 = vmatpush1.bf16.msra.mxu0 0
      %893 = vmatprep.subr.bf16.mxu0 0
      %894 = vmatpush1.bf16.msra.mxu0 0
      %895 = vmatprep.subr.bf16.mxu0 0
      %896 = vmatpush1.bf16.msra.mxu0 %v876
      %897 = vmatprep.subr.bf16.mxu0 0
      %898 = vmatpush2.bf16.msra.mxu0 0
      %899 = vmatprep.subr.bf16.mxu0 0
      %900 = vmatpush2.bf16.msra.mxu0 0
      %901 = vmatprep.subr.bf16.mxu0 0
      %902 = vmatpush2.bf16.msra.mxu0 0
      %903 = vmatprep.subr.bf16.mxu0 0
      %904 = vmatpush2.bf16.msra.mxu0 0
      %905 = vmatprep.subr.bf16.mxu0 0
      %906 = vmatpush2.bf16.msra.mxu0 0
      %907 = vmatprep.subr.bf16.mxu0 0
      %908 = vmatpush2.bf16.msra.mxu0 0
      %909 = vmatprep.subr.bf16.mxu0 0
      %910 = vmatpush2.bf16.msra.mxu0 0
      %911 = vmatprep.subr.bf16.mxu0 0
      %912 = vmatpush2.bf16.msra.mxu0 0
      %913 = vmatprep.mubr.bf16.mxu0 0
      %914 = vmatmul.mubr.bf16.gmra.mxu0 %v879
      %v915 = vpop.f32.mrf.mxu0
      %v916 = vadd.f32 0.0, %v915
      %v917 = vpop.f32.mrf.mxu0
      %v918 = vpop.f32.mrf.mxu0
      %v919 = vadd.f32 0.0, %v918
      %v920 = vpop.f32.mrf.mxu0
      %921 = vdwg.mxu0
      %v922 = vpack.c.bf16 %v919, %v916
      %v923 = vlaneseq
      %v924 = vshrl.u32 %v923, 7
      %v925 = vsub.s32 3, %v924
      %v926 = vrot.slane %v339, %v925
      %927 = vmatprep.subr.bf16.mxu0 0
      %928 = vmatpush1.bf16.msra.mxu0 0
      %929 = vmatprep.subr.bf16.mxu0 0
      %930 = vmatpush1.bf16.msra.mxu0 0
      %931 = vmatprep.subr.bf16.mxu0 0
      %932 = vmatpush1.bf16.msra.mxu0 0
      %933 = vmatprep.subr.bf16.mxu0 0
      %934 = vmatpush1.bf16.msra.mxu0 0
      %935 = vmatprep.subr.bf16.mxu0 0
      %936 = vmatpush1.bf16.msra.mxu0 0
      %937 = vmatprep.subr.bf16.mxu0 0
      %938 = vmatpush1.bf16.msra.mxu0 0
      %939 = vmatprep.subr.bf16.mxu0 0
      %940 = vmatpush1.bf16.msra.mxu0 0
      %941 = vmatprep.subr.bf16.mxu0 0
      %942 = vmatpush1.bf16.msra.mxu0 %v922
      %943 = vmatprep.subr.bf16.mxu0 0
      %944 = vmatpush2.bf16.msra.mxu0 0
      %945 = vmatprep.subr.bf16.mxu0 0
      %946 = vmatpush2.bf16.msra.mxu0 0
      %947 = vmatprep.subr.bf16.mxu0 0
      %948 = vmatpush2.bf16.msra.mxu0 0
      %949 = vmatprep.subr.bf16.mxu0 0
      %950 = vmatpush2.bf16.msra.mxu0 0
      %951 = vmatprep.subr.bf16.mxu0 0
      %952 = vmatpush2.bf16.msra.mxu0 0
      %953 = vmatprep.subr.bf16.mxu0 0
      %954 = vmatpush2.bf16.msra.mxu0 0
      %955 = vmatprep.subr.bf16.mxu0 0
      %956 = vmatpush2.bf16.msra.mxu0 0
      %957 = vmatprep.subr.bf16.mxu0 0
      %958 = vmatpush2.bf16.msra.mxu0 0
      %959 = vmatprep.mubr.bf16.mxu0 0
      %960 = vmatmul.mubr.bf16.gmra.mxu0 %v826
      %v961 = vpop.f32.mrf.mxu0
      %v962 = vadd.f32 %v926, %v961
      %v963 = vpop.f32.mrf.mxu0
      %v964 = vpop.f32.mrf.mxu0
      %v965 = vadd.f32 %v926, %v964
      %v966 = vpop.f32.mrf.mxu0
      %967 = vdwg.mxu0
      %v968 = vsel %vm634, %v962, -inf
      %969 = vmax.xlane.f32.xlu0 %v968
      %v970 = vpop.xlane.xlu0 %969
      %v971 = vsel %vm634, %v965, -inf
      %972 = vmax.xlane.f32.xlu0 %v971
      %v973 = vpop.xlane.xlu0 %972
      %v974 = vsub.f32 %v962, %v970
      %v975 = vsub.f32 %v965, %v973
      %v976 = vmul.f32 %v974, 1.442695
      %v977 = vpow.pop %v976
      %v978 = vmul.f32 %v975, 1.442695
      %v979 = vpow.pop %v978
      %v980 = vsel %vm634, %v977, 0.0
      %981 = vadd.xlane.f32.xlu0 %v980
      %v982 = vpop.xlane.xlu0 %981
      %v983 = vsel %vm634, %v979, 0.0
      %984 = vadd.xlane.f32.xlu0 %v983
      %v985 = vpop.xlane.xlu0 %984
      %v986 = vlog2.pop %v982
      %v987 = vmul.f32 %v986, 0.6931472
      %v988 = vlog2.pop %v985
      %v989 = vmul.f32 %v988, 0.6931472
      %v990 = vadd.f32 %v970, %v987
      %v991 = vadd.f32 %v973, %v989
      %v992 = vsub.f32 %v962, %v990
      %v993 = vsub.f32 %v965, %v991
      %v994 = vlaneseq
      %v995 = vshrl.u32 %v994, 7
      %v996 = vsub.s32 4, %v995
      %v997 = vrot.slane %v339, %v996
      %v1000 = vunpack.c.l.b16 %v399
      %v1001 = vunpack.c.l.b16 %v400
      %v1002 = vpack.c.b16 %v1001, %v1000
      %1004 = vrot.lane.b32.xlu0 %v815, 112
      %v1005 = vpop.permute.xlu0 %1004
      %v1008 = vsel %vm490, %v1002, 0
      %1010 = vmatprep.subr.bf16.mxu0 0
      %1011 = vmatpush1.bf16.msra.mxu0 0
      %1012 = vmatprep.subr.bf16.mxu0 0
      %1013 = vmatpush1.bf16.msra.mxu0 0
      %1014 = vmatprep.subr.bf16.mxu0 0
      %1015 = vmatpush1.bf16.msra.mxu0 0
      %1016 = vmatprep.subr.bf16.mxu0 0
      %1017 = vmatpush1.bf16.msra.mxu0 0
      %1018 = vmatprep.subr.bf16.mxu0 0
      %1019 = vmatpush1.bf16.msra.mxu0 0
      %1020 = vmatprep.subr.bf16.mxu0 0
      %1021 = vmatpush1.bf16.msra.mxu0 0
      %1022 = vmatprep.subr.bf16.mxu0 0
      %1023 = vmatpush1.bf16.msra.mxu0 0
      %1024 = vmatprep.subr.bf16.mxu0 0
      %1025 = vmatpush1.bf16.msra.mxu0 %v1005
      %1026 = vmatprep.subr.bf16.mxu0 0
      %1027 = vmatpush2.bf16.msra.mxu0 0
      %1028 = vmatprep.subr.bf16.mxu0 0
      %1029 = vmatpush2.bf16.msra.mxu0 0
      %1030 = vmatprep.subr.bf16.mxu0 0
      %1031 = vmatpush2.bf16.msra.mxu0 0
      %1032 = vmatprep.subr.bf16.mxu0 0
      %1033 = vmatpush2.bf16.msra.mxu0 0
      %1034 = vmatprep.subr.bf16.mxu0 0
      %1035 = vmatpush2.bf16.msra.mxu0 0
      %1036 = vmatprep.subr.bf16.mxu0 0
      %1037 = vmatpush2.bf16.msra.mxu0 0
      %1038 = vmatprep.subr.bf16.mxu0 0
      %1039 = vmatpush2.bf16.msra.mxu0 0
      %1040 = vmatprep.subr.bf16.mxu0 0
      %1041 = vmatpush2.bf16.msra.mxu0 0
      %1042 = vmatprep.mubr.bf16.mxu0 0
      %1043 = vmatmul.mubr.bf16.gmra.mxu0 %v1008
      %v1044 = vpop.f32.mrf.mxu0
      %v1045 = vadd.f32 %v997, %v1044
      %v1046 = vpop.f32.mrf.mxu0
      %v1047 = vpop.f32.mrf.mxu0
      %v1048 = vadd.f32 %v997, %v1047
      %v1049 = vpop.f32.mrf.mxu0
      %1050 = vdwg.mxu0
      %v1051 = vmax.f32 %v1045, 0.0
      %v1052 = vmax.f32 %v1048, 0.0
      %v1053 = vpack.c.bf16 %v1052, %v1051
      %v1056 = vunpack.c.l.b16 %v361
      %v1057 = vunpack.c.l.b16 %v362
      %v1058 = vpack.c.b16 %v1057, %v1056
      %v1061 = vsel %vm490, %v1053, 0
      %1063 = vmatprep.subr.bf16.mxu0 0
      %1064 = vmatpush1.bf16.msra.mxu0 0
      %1065 = vmatprep.subr.bf16.mxu0 0
      %1066 = vmatpush1.bf16.msra.mxu0 0
      %1067 = vmatprep.subr.bf16.mxu0 0
      %1068 = vmatpush1.bf16.msra.mxu0 0
      %1069 = vmatprep.subr.bf16.mxu0 0
      %1070 = vmatpush1.bf16.msra.mxu0 0
      %1071 = vmatprep.subr.bf16.mxu0 0
      %1072 = vmatpush1.bf16.msra.mxu0 0
      %1073 = vmatprep.subr.bf16.mxu0 0
      %1074 = vmatpush1.bf16.msra.mxu0 0
      %1075 = vmatprep.subr.bf16.mxu0 0
      %1076 = vmatpush1.bf16.msra.mxu0 0
      %1077 = vmatprep.subr.bf16.mxu0 0
      %1078 = vmatpush1.bf16.msra.mxu0 %v1058
      %1079 = vmatprep.subr.bf16.mxu0 0
      %1080 = vmatpush2.bf16.msra.mxu0 0
      %1081 = vmatprep.subr.bf16.mxu0 0
      %1082 = vmatpush2.bf16.msra.mxu0 0
      %1083 = vmatprep.subr.bf16.mxu0 0
      %1084 = vmatpush2.bf16.msra.mxu0 0
      %1085 = vmatprep.subr.bf16.mxu0 0
      %1086 = vmatpush2.bf16.msra.mxu0 0
      %1087 = vmatprep.subr.bf16.mxu0 0
      %1088 = vmatpush2.bf16.msra.mxu0 0
      %1089 = vmatprep.subr.bf16.mxu0 0
      %1090 = vmatpush2.bf16.msra.mxu0 0
      %1091 = vmatprep.subr.bf16.mxu0 0
      %1092 = vmatpush2.bf16.msra.mxu0 0
      %1093 = vmatprep.subr.bf16.mxu0 0
      %1094 = vmatpush2.bf16.msra.mxu0 0
      %1095 = vmatprep.mubr.bf16.mxu0 0
      %1096 = vmatmul.mubr.bf16.gmra.mxu0 %v1061
      %v1097 = vpop.f32.mrf.mxu0
      %v1098 = vadd.f32 0.0, %v1097
      %v1099 = vpop.f32.mrf.mxu0
      %v1100 = vpop.f32.mrf.mxu0
      %v1101 = vadd.f32 0.0, %v1100
      %v1102 = vpop.f32.mrf.mxu0
      %1103 = vdwg.mxu0
      %v1104 = vpack.c.bf16 %v1101, %v1098
      %v1105 = vlaneseq
      %v1106 = vshrl.u32 %v1105, 7
      %v1107 = vsub.s32 5, %v1106
      %v1108 = vrot.slane %v339, %v1107
      %1109 = vmatprep.subr.bf16.mxu0 0
      %1110 = vmatpush1.bf16.msra.mxu0 0
      %1111 = vmatprep.subr.bf16.mxu0 0
      %1112 = vmatpush1.bf16.msra.mxu0 0
      %1113 = vmatprep.subr.bf16.mxu0 0
      %1114 = vmatpush1.bf16.msra.mxu0 0
      %1115 = vmatprep.subr.bf16.mxu0 0
      %1116 = vmatpush1.bf16.msra.mxu0 0
      %1117 = vmatprep.subr.bf16.mxu0 0
      %1118 = vmatpush1.bf16.msra.mxu0 0
      %1119 = vmatprep.subr.bf16.mxu0 0
      %1120 = vmatpush1.bf16.msra.mxu0 0
      %1121 = vmatprep.subr.bf16.mxu0 0
      %1122 = vmatpush1.bf16.msra.mxu0 0
      %1123 = vmatprep.subr.bf16.mxu0 0
      %1124 = vmatpush1.bf16.msra.mxu0 %v1104
      %1125 = vmatprep.subr.bf16.mxu0 0
      %1126 = vmatpush2.bf16.msra.mxu0 0
      %1127 = vmatprep.subr.bf16.mxu0 0
      %1128 = vmatpush2.bf16.msra.mxu0 0
      %1129 = vmatprep.subr.bf16.mxu0 0
      %1130 = vmatpush2.bf16.msra.mxu0 0
      %1131 = vmatprep.subr.bf16.mxu0 0
      %1132 = vmatpush2.bf16.msra.mxu0 0
      %1133 = vmatprep.subr.bf16.mxu0 0
      %1134 = vmatpush2.bf16.msra.mxu0 0
      %1135 = vmatprep.subr.bf16.mxu0 0
      %1136 = vmatpush2.bf16.msra.mxu0 0
      %1137 = vmatprep.subr.bf16.mxu0 0
      %1138 = vmatpush2.bf16.msra.mxu0 0
      %1139 = vmatprep.subr.bf16.mxu0 0
      %1140 = vmatpush2.bf16.msra.mxu0 0
      %1141 = vmatprep.mubr.bf16.mxu0 0
      %1142 = vmatmul.mubr.bf16.gmra.mxu0 %v1008
      %v1143 = vpop.f32.mrf.mxu0
      %v1144 = vadd.f32 %v1108, %v1143
      %v1145 = vpop.f32.mrf.mxu0
      %v1146 = vpop.f32.mrf.mxu0
      %v1147 = vadd.f32 %v1108, %v1146
      %v1148 = vpop.f32.mrf.mxu0
      %1149 = vdwg.mxu0
      %v1150 = vsel %vm634, %v1144, -inf
      %1151 = vmax.xlane.f32.xlu0 %v1150
      %v1152 = vpop.xlane.xlu0 %1151
      %v1153 = vsel %vm634, %v1147, -inf
      %1154 = vmax.xlane.f32.xlu0 %v1153
      %v1155 = vpop.xlane.xlu0 %1154
      %v1156 = vsub.f32 %v1144, %v1152
      %v1157 = vsub.f32 %v1147, %v1155
      %v1158 = vmul.f32 %v1156, 1.442695
      %v1159 = vpow.pop %v1158
      %v1160 = vmul.f32 %v1157, 1.442695
      %v1161 = vpow.pop %v1160
      %v1162 = vsel %vm634, %v1159, 0.0
      %1163 = vadd.xlane.f32.xlu0 %v1162
      %v1164 = vpop.xlane.xlu0 %1163
      %v1165 = vsel %vm634, %v1161, 0.0
      %1166 = vadd.xlane.f32.xlu0 %v1165
      %v1167 = vpop.xlane.xlu0 %1166
      %v1168 = vlog2.pop %v1164
      %v1169 = vmul.f32 %v1168, 0.6931472
      %v1170 = vlog2.pop %v1167
      %v1171 = vmul.f32 %v1170, 0.6931472
      %v1172 = vadd.f32 %v1152, %v1169
      %v1173 = vadd.f32 %v1155, %v1171
      %v1174 = vsub.f32 %v1144, %v1172
      %v1175 = vsub.f32 %v1147, %v1173
      %v1176 = vld [vmem:[%s6] sm:$0xff]
      %v1177 = vld [vmem:[%s6 + $0x8] sm:$0xff]
      %v1178 = vmul.f32 %v992, %v1176
      %v1179 = vmul.f32 %v993, %v1177
      %v1180 = vlaneseq
      %v1181 = vshrl.u32 %v1180, 7
      %v1182 = vsub.s32 0, %v1181
      %v1183 = vrot.slane %v340, %v1182
      %v1184 = vadd.f32 %v1178, %v1183
      %v1185 = vadd.f32 %v1179, %v1183
      %v1186 = vmax.f32 %v1184, 0.0
      %v1187 = vmax.f32 %v1185, 0.0
      %v1188 = vld [vmem:[%s7] sm:$0xff]
      %v1189 = vld [vmem:[%s7 + $0x8] sm:$0xff]
      %v1190 = vmul.f32 %v1174, %v1188
      %v1191 = vmul.f32 %v1175, %v1189
      %v1192 = vlaneseq
      %v1193 = vshrl.u32 %v1192, 7
      %v1194 = vsub.s32 1, %v1193
      %v1195 = vrot.slane %v340, %v1194
      %v1196 = vadd.f32 %v1190, %v1195
      %v1197 = vadd.f32 %v1191, %v1195
      %v1198 = vmax.f32 %v1196, 0.0
      %v1199 = vmax.f32 %v1197, 0.0
      %1202 = vrot.lane.b32.xlu0 %v1198, 64
      %v1203 = vpop.permute.xlu0 %1202
      %1204 = vrot.lane.b32.xlu0 %v1199, 64
      %v1205 = vpop.permute.xlu0 %1204
      %v1208 = vsel %vm634, %v1186, %v1203
      %v1209 = vsel %vm634, %v1187, %v1205
      %v1210 = vpack.c.bf16 %v1209, %v1208
      %v1211 = vlaneseq
      %v1212 = vshrl.u32 %v1211, 7
      %v1213 = vsub.s32 2, %v1212
      %v1214 = vrot.slane %v340, %v1213
      %v1231 = vunpack.c.l.b16 %v379
      %v1232 = vunpack.c.l.b16 %v380
      %v1233 = vunpack.c.l.b16 %v381
      %v1234 = vunpack.c.l.b16 %v382
      %v1235 = vunpack.c.l.b16 %v383
      %v1236 = vunpack.c.l.b16 %v384
      %v1237 = vunpack.c.l.b16 %v385
      %v1238 = vunpack.c.l.b16 %v386
      %v1239 = vunpack.c.l.b16 %v387
      %v1240 = vunpack.c.l.b16 %v388
      %v1241 = vunpack.c.l.b16 %v389
      %v1242 = vunpack.c.l.b16 %v390
      %v1243 = vunpack.c.l.b16 %v391
      %v1244 = vunpack.c.l.b16 %v392
      %v1245 = vunpack.c.l.b16 %v393
      %v1246 = vunpack.c.l.b16 %v394
      %v1247 = vpack.c.b16 %v1232, %v1231
      %v1248 = vpack.c.b16 %v1234, %v1233
      %v1249 = vpack.c.b16 %v1236, %v1235
      %v1250 = vpack.c.b16 %v1238, %v1237
      %v1251 = vpack.c.b16 %v1240, %v1239
      %v1252 = vpack.c.b16 %v1242, %v1241
      %v1253 = vpack.c.b16 %v1244, %v1243
      %v1254 = vpack.c.b16 %v1246, %v1245
      %1263 = vmatprep.subr.bf16.mxu0 0
      %1264 = vmatpush1.bf16.msra.mxu0 %v1254
      %1265 = vmatprep.subr.bf16.mxu0 0
      %1266 = vmatpush1.bf16.msra.mxu0 %v1253
      %1267 = vmatprep.subr.bf16.mxu0 0
      %1268 = vmatpush1.bf16.msra.mxu0 %v1252
      %1269 = vmatprep.subr.bf16.mxu0 0
      %1270 = vmatpush1.bf16.msra.mxu0 %v1251
      %1271 = vmatprep.subr.bf16.mxu0 0
      %1272 = vmatpush1.bf16.msra.mxu0 %v1250
      %1273 = vmatprep.subr.bf16.mxu0 0
      %1274 = vmatpush1.bf16.msra.mxu0 %v1249
      %1275 = vmatprep.subr.bf16.mxu0 0
      %1276 = vmatpush1.bf16.msra.mxu0 %v1248
      %1277 = vmatprep.subr.bf16.mxu0 0
      %1278 = vmatpush1.bf16.msra.mxu0 %v1247
      %1279 = vmatprep.subr.bf16.mxu0 0
      %1280 = vmatpush2.bf16.msra.mxu0 0
      %1281 = vmatprep.subr.bf16.mxu0 0
      %1282 = vmatpush2.bf16.msra.mxu0 0
      %1283 = vmatprep.subr.bf16.mxu0 0
      %1284 = vmatpush2.bf16.msra.mxu0 0
      %1285 = vmatprep.subr.bf16.mxu0 0
      %1286 = vmatpush2.bf16.msra.mxu0 0
      %1287 = vmatprep.subr.bf16.mxu0 0
      %1288 = vmatpush2.bf16.msra.mxu0 0
      %1289 = vmatprep.subr.bf16.mxu0 0
      %1290 = vmatpush2.bf16.msra.mxu0 0
      %1291 = vmatprep.subr.bf16.mxu0 0
      %1292 = vmatpush2.bf16.msra.mxu0 0
      %1293 = vmatprep.subr.bf16.mxu0 0
      %1294 = vmatpush2.bf16.msra.mxu0 0
      %1295 = vmatprep.mubr.bf16.mxu0 0
      %1296 = vmatmul.mubr.bf16.gmra.mxu0 %v1210
      %v1297 = vpop.f32.mrf.mxu0
      %v1298 = vadd.f32 %v1214, %v1297
      %v1299 = vpop.f32.mrf.mxu0
      %v1300 = vpop.f32.mrf.mxu0
      %v1301 = vadd.f32 %v1214, %v1300
      %v1302 = vpop.f32.mrf.mxu0
      %1303 = vdwg.mxu0
      %v1304 = vlaneseq
      %v1305 = vshrl.u32 %v1304, 7
      %v1306 = vsub.s32 3, %v1305
      %v1307 = vrot.slane %v340, %v1306
      %v1316 = vunpack.c.l.b16 %v371
      %v1317 = vunpack.c.l.b16 %v372
      %v1318 = vunpack.c.l.b16 %v373
      %v1319 = vunpack.c.l.b16 %v374
      %v1320 = vunpack.c.l.b16 %v375
      %v1321 = vunpack.c.l.b16 %v376
      %v1322 = vunpack.c.l.b16 %v377
      %v1323 = vunpack.c.l.b16 %v378
      %v1324 = vpack.c.b16 %v1317, %v1316
      %v1325 = vpack.c.b16 %v1319, %v1318
      %v1326 = vpack.c.b16 %v1321, %v1320
      %v1327 = vpack.c.b16 %v1323, %v1322
      %v1332 = vsel %vm435, %v1327, 0
      %1334 = vmatprep.subr.bf16.mxu0 0
      %1335 = vmatpush1.bf16.msra.mxu0 0
      %1336 = vmatprep.subr.bf16.mxu0 0
      %1337 = vmatpush1.bf16.msra.mxu0 0
      %1338 = vmatprep.subr.bf16.mxu0 0
      %1339 = vmatpush1.bf16.msra.mxu0 0
      %1340 = vmatprep.subr.bf16.mxu0 0
      %1341 = vmatpush1.bf16.msra.mxu0 0
      %1342 = vmatprep.subr.bf16.mxu0 0
      %1343 = vmatpush1.bf16.msra.mxu0 %v1332
      %1344 = vmatprep.subr.bf16.mxu0 0
      %1345 = vmatpush1.bf16.msra.mxu0 %v1326
      %1346 = vmatprep.subr.bf16.mxu0 0
      %1347 = vmatpush1.bf16.msra.mxu0 %v1325
      %1348 = vmatprep.subr.bf16.mxu0 0
      %1349 = vmatpush1.bf16.msra.mxu0 %v1324
      %1350 = vmatprep.subr.bf16.mxu0 0
      %1351 = vmatpush2.bf16.msra.mxu0 0
      %1352 = vmatprep.subr.bf16.mxu0 0
      %1353 = vmatpush2.bf16.msra.mxu0 0
      %1354 = vmatprep.subr.bf16.mxu0 0
      %1355 = vmatpush2.bf16.msra.mxu0 0
      %1356 = vmatprep.subr.bf16.mxu0 0
      %1357 = vmatpush2.bf16.msra.mxu0 0
      %1358 = vmatprep.subr.bf16.mxu0 0
      %1359 = vmatpush2.bf16.msra.mxu0 0
      %1360 = vmatprep.subr.bf16.mxu0 0
      %1361 = vmatpush2.bf16.msra.mxu0 0
      %1362 = vmatprep.subr.bf16.mxu0 0
      %1363 = vmatpush2.bf16.msra.mxu0 0
      %1364 = vmatprep.subr.bf16.mxu0 0
      %1365 = vmatpush2.bf16.msra.mxu0 0
      %1366 = vmatprep.mubr.bf16.mxu0 0
      %1367 = vmatmul.mubr.bf16.gmra.mxu0 %v433
      %v1368 = vpop.f32.mrf.mxu0
      %v1369 = vadd.f32 %v1307, %v1368
      %v1370 = vpop.f32.mrf.mxu0
      %v1371 = vpop.f32.mrf.mxu0
      %v1372 = vadd.f32 %v1307, %v1371
      %v1373 = vpop.f32.mrf.mxu0
      %1374 = vdwg.mxu0
      %1377 = vrot.lane.b32.xlu0 %v1174, 64
      %v1378 = vpop.permute.xlu0 %1377
      %1379 = vrot.lane.b32.xlu0 %v1175, 64
      %v1380 = vpop.permute.xlu0 %1379
      %v1383 = vsel %vm634, %v992, %v1378
      %v1384 = vsel %vm634, %v993, %v1380
      %1385 = vst [vmem:[%s336] sm:$0xff] %v1383
      %1386 = vst [vmem:[%s336 + $0x10] sm:$0xff] %v1384
      %1389 = vrot.lane.b32.xlu0 %v1298, 64
      %v1390 = vpop.permute.xlu0 %1389
      %1391 = vrot.lane.b32.xlu0 %v1301, 64
      %v1392 = vpop.permute.xlu0 %1391
      %v1395 = vsel %vm634, %v1369, %v1390
      %v1396 = vsel %vm634, %v1372, %v1392
      %1397 = vst [vmem:[%s336 + $0x8] sm:$0xff] %v1395
      %1398 = vst [vmem:[%s336 + $0x18] sm:$0xff] %v1396
      %s1399 = smul.u32 2, %s20
      %p1400 = scmp.lt.s32.totalorder %s1399, 3
      %s1401 = scalar_select %p1400, %s1399, 3
      %s1402 = smul.addr %s1401, 2
      %s1403 = smul.addr %s1402, 8
      %s1404 = scalar_lea.vmem %s9, %s1403
      // Predicated region
      $region57: #{mgdn_forward.1} parent=55 // pred_check
        %p1405 = pneg %p232
      $region58: #{mgdn_forward.1} parent=55 // pred_check_branch
        %1407 = sbr.rel (%p1405) target = $region60
      $region59: #{mgdn_forward.1} parent=55 // pred_region
        %s1408 = smul.u32 2, %s20
      $region60: #{mgdn_forward.1} parent=55 // pred_fallthru
        _
    $region56: #{mgdn_forward.1} parent=5 // pred_fallthru
      _
    %p1409 = scmp.le.s32.totalorder 2, %s15
    // Predicated region
    $region61: #{mgdn_forward.1} parent=5 // pred_check
      %p1410 = pneg %p1409
    $region62: #{mgdn_forward.1} parent=5 // pred_check_branch
      %1412 = sbr.rel (%p1410) target = $region64
    $region63: #{mgdn_forward.1} parent=5 // pred_region
      %s1413 = ssub.s32 %s15, 2
      // Predicated region
      $region65: #{mgdn_forward.1} parent=63 // pred_check
        %p1414 = pneg %p238
      $region66: #{mgdn_forward.1} parent=63 // pred_check_branch
        %1416 = sbr.rel (%p1414) target = $region68
      $region67: #{mgdn_forward.1} parent=63 // pred_region
        %s1417 = smul.u32 2, %s21
        %p1418 = scmp.lt.s32.totalorder %s1417, 3
        %s1419 = scalar_select %p1418, %s1417, 3
        %s1420 = smul.addr %s1419, 2
        %s1421 = smul.addr %s1420, 8
        %s1422 = scalar_lea.vmem %s9, %s1421
      $region68: #{mgdn_forward.1} parent=63 // pred_fallthru
        _
    $region64: #{mgdn_forward.1} parent=5 // pred_fallthru
      _
  $region6: #{mgdn_forward.1} parent=0 // loop_footer
    %s19 = sadd.s32 1, %s15
  $region7: #{mgdn_forward.1} parent=0 // loop_footer_branch
    %14 = sbr.rel target = $region3
  $region8: #{mgdn_forward.1} parent=0 // loop_exit
    _

</llo_original>
